<compile_context>
chip_gen: v7x
topology: tpu7x:2x2x1
jax: 0.10.0
libtpu: 0.0.40
codegen_flags: <defaults>
</compile_context>

<pallas_src>
import jax
import jax.numpy as jnp
from jax.experimental import pallas as pl
from jax.experimental.pallas import tpu as pltpu


def _round_up(v, m):
    return ((v + m - 1) // m) * m


def _pick_tile_b(bp):
    for tb in (128, 64, 32, 16, 8):
        if bp % tb == 0:
            return tb
    return bp


def lstm_classifier_kernel(emb_ref, idx_ref, wih_ref, whh_ref, b_ref,
                           wout_ref, bout_ref, out_ref, xproj_ref):
    T, TB, _ = emb_ref.shape            # (T, TILE_B, E) bf16, time-major
    HP = whh_ref.shape[0]               # lane-aligned per-gate width (multiple of 128)

    bias = b_ref[...]                   # (1, 4*HP) f32, hoisted out of the loops
    wih = wih_ref[...]                  # (E, 4*HP) bf16
    whh = whh_ref[...]                  # (HP, 4*HP) bf16, loop-invariant
    idx = idx_ref[...]                  # (TILE_B, 1) int32; -1 for padded rows

    # --- Phase 1: hoisted input projection (independent of h -> off the serial
    # path).  bf16 MXU matmuls, f32 accumulation into VMEM scratch.
    for t in range(T):
        xproj_ref[t] = (jnp.dot(emb_ref[t], wih,
                                preferred_element_type=jnp.float32) + bias)

    # --- Phase 2: recurrence.  T is small & static -> fully unrolled; only
    # h @ W_hh stays on the serial critical path.  Gate slices are 128-lane
    # aligned so each step is pure full-width VPU/EUP work.
    h = jnp.zeros((TB, HP), jnp.float32)
    c = jnp.zeros((TB, HP), jnp.float32)
    final = jnp.zeros((TB, HP), jnp.float32)
    for t in range(T):
        gates = xproj_ref[t] + jnp.dot(h.astype(jnp.bfloat16), whh,
                                       preferred_element_type=jnp.float32)
        sig = jax.nn.sigmoid(gates[:, :3 * HP])         # i|f|o in one EUP pass
        i_g = sig[:, :HP]
        f_g = sig[:, HP:2 * HP]
        o_g = sig[:, 2 * HP:3 * HP]
        g_g = jnp.tanh(gates[:, 3 * HP:])
        c = f_g * c + i_g * g_g
        h = o_g * jnp.tanh(c)
        # t == lengths-1 is never a pad token (right padding), so the per-step
        # pad mask is redundant: just latch h at the final valid step.
        final = jnp.where(idx == t, h, final)

    # TODO(synk): nn.Dropout(p=0.5) omitted — identity in eval mode.
    # Lane-dense (OP = multiple of 128) output -> unmasked vst.
    out_ref[...] = (jnp.dot(final, wout_ref[...],
                            preferred_element_type=jnp.float32) + bout_ref[...])


def lstm_classifier_forward(x, emb_table, w_ih, w_hh, b_ih, b_hh, w_out, b_out):
    """x: (B, T) int32 token ids (pad id = 1). Implements the B > 1 path of the
    PyTorch forward (eval mode)."""
    B, T = x.shape
    E = emb_table.shape[1]
    H = w_hh.shape[1]
    O = w_out.shape[0]

    HP = _round_up(H, 128)              # lane-aligned per-gate width
    OP = _round_up(O, 128)              # lane-dense output head
    G = 4 * HP
    Bp = _round_up(max(B, 8), 8)        # pad batch to sublane height
    TILE_B = _pick_tile_b(Bp)
    nb = Bp // TILE_B

    # lengths / final-step index computed outside the kernel (no in-kernel reduce)
    lengths = jnp.sum((x != 1).astype(jnp.int32), axis=1)            # (B,)
    idx = (lengths - 1).astype(jnp.int32)
    idx_p = jnp.full((Bp, 1), -1, jnp.int32).at[:B, 0].set(idx)      # (Bp, 1)

    # Embedding gather (padding row 1 of the table is zero), time-major, bf16.
    # TODO(synk): at production B*T, fold this gather into the kernel via
    # PrefetchScalarGridSpec scalar-prefetched token ids to avoid the extra HBM pass.
    emb = jnp.take(emb_table, x, axis=0).astype(jnp.bfloat16)        # (B, T, E)
    emb_tm = jnp.transpose(emb, (1, 0, 2))                           # (T, B, E)
    emb_p = jnp.zeros((T, Bp, E), jnp.bfloat16).at[:, :B, :].set(emb_tm)

    # Reorder PyTorch gate blocks (i, f, g, o) -> (i, f, o, g) and pad every gate
    # block to HP columns (zeros) so gate slices are 128-lane aligned.  Padded
    # hidden columns stay exactly zero through the recurrence.
    def gate_blocks(w):
        i, f, g, o = jnp.split(jnp.asarray(w, jnp.float32), 4, axis=0)
        return (i, f, o, g)

    wih_blocks = gate_blocks(w_ih)                                   # each (H, E)
    whh_blocks = gate_blocks(w_hh)                                   # each (H, H)
    b_blocks = gate_blocks((jnp.asarray(b_ih, jnp.float32)
                            + jnp.asarray(b_hh, jnp.float32)).reshape(4 * H, 1))

    wih_t = jnp.zeros((E, G), jnp.float32)
    whh_t = jnp.zeros((HP, G), jnp.float32)
    bvec = jnp.zeros((1, G), jnp.float32)
    for gi in range(4):
        c0 = gi * HP
        wih_t = wih_t.at[:, c0:c0 + H].set(wih_blocks[gi].T)
        whh_t = whh_t.at[:H, c0:c0 + H].set(whh_blocks[gi].T)
        bvec = bvec.at[0, c0:c0 + H].set(b_blocks[gi][:, 0])

    wih_b = wih_t.astype(jnp.bfloat16)                               # bf16 MXU operands
    whh_b = whh_t.astype(jnp.bfloat16)

    wout_t = jnp.zeros((HP, OP), jnp.float32).at[:H, :O].set(
        jnp.asarray(w_out, jnp.float32).T)
    bout = jnp.zeros((1, OP), jnp.float32).at[0, :O].set(
        jnp.asarray(b_out, jnp.float32))

    logits_p = pl.pallas_call(
        lstm_classifier_kernel,
        out_shape=jax.ShapeDtypeStruct((Bp, OP), jnp.float32),
        grid_spec=pltpu.PrefetchScalarGridSpec(
            num_scalar_prefetch=0,
            grid=(nb,),
            in_specs=[
                pl.BlockSpec((T, TILE_B, E), lambda i: (0, i, 0)),   # emb (time-major)
                pl.BlockSpec((TILE_B, 1), lambda i: (i, 0)),         # final-step index
                pl.BlockSpec((E, G), lambda i: (0, 0)),              # W_ih^T (padded)
                pl.BlockSpec((HP, G), lambda i: (0, 0)),             # W_hh^T (padded)
                pl.BlockSpec((1, G), lambda i: (0, 0)),              # gate bias
                pl.BlockSpec((HP, OP), lambda i: (0, 0)),            # W_out^T (padded)
                pl.BlockSpec((1, OP), lambda i: (0, 0)),             # b_out
            ],
            out_specs=pl.BlockSpec((TILE_B, OP), lambda i: (i, 0)),
            scratch_shapes=[pltpu.VMEM((T, TILE_B, G), jnp.float32)],
        ),
        compiler_params=pltpu.CompilerParams(
            dimension_semantics=("parallel",),        # batch tiles -> 2 TCs on v7x
            vmem_limit_bytes=32 * 1024 * 1024,
        ),
    )(emb_p, idx_p, wih_b, whh_b, bvec, wout_t, bout)
    return logits_p[:B, :O]


def reference_forward(x, emb_table, w_ih, w_hh, b_ih, b_hh, w_out, b_out):
    """Pure-JAX f32 replica of the PyTorch forward (B > 1 path, eval mode)."""
    B, T = x.shape
    H = w_hh.shape[1]
    emb = emb_table[x]
    h = jnp.zeros((B, H), jnp.float32)
    c = jnp.zeros((B, H), jnp.float32)
    outs = []
    for t in range(T):
        g = emb[:, t] @ w_ih.T + b_ih + h @ w_hh.T + b_hh
        i = jax.nn.sigmoid(g[:, :H])
        f = jax.nn.sigmoid(g[:, H:2 * H])
        gg = jnp.tanh(g[:, 2 * H:3 * H])
        o = jax.nn.sigmoid(g[:, 3 * H:])
        c = f * c + i * gg
        h = o * jnp.tanh(c)
        outs.append(h)
    outs = jnp.stack(outs, axis=1)                                   # (B, T, H)
    outs = jnp.where((x == 1)[:, :, None], 0.0, outs)
    lengths = jnp.sum(x != 1, axis=1)
    final = outs[jnp.arange(B), lengths - 1]
    return final @ w_out.T + b_out


if __name__ == "__main__":
    V, E, H, O = 50, 16, 32, 4     # vocab, embedding_dim, hidden_dim, output_dim
    B, T = 2, 8

    key = jax.random.PRNGKey(0)
    k1, k2, k3, k4, k5, k6, k7, kx = jax.random.split(key, 8)
    s = 1.0 / float(jnp.sqrt(jnp.float32(H)))

    emb_table = jax.random.normal(k1, (V, E), jnp.float32)
    emb_table = emb_table.at[1].set(0.0)                             # padding_idx=1
    w_ih = jax.random.uniform(k2, (4 * H, E), jnp.float32, -s, s)
    w_hh = jax.random.uniform(k3, (4 * H, H), jnp.float32, -s, s)
    b_ih = jax.random.uniform(k4, (4 * H,), jnp.float32, -s, s)
    b_hh = jax.random.uniform(k5, (4 * H,), jnp.float32, -s, s)
    w_out = jax.random.uniform(k6, (O, H), jnp.float32, -s, s)
    b_out = jax.random.uniform(k7, (O,), jnp.float32, -s, s)

    # token ids in [2, V); pad (id 1) the tail of row 0 to make ragged lengths.
    x = jax.random.randint(kx, (B, T), 2, V, jnp.int32)
    x = x.at[0, 5:].set(1)                                           # lengths = [5, 8]

    logits = lstm_classifier_forward(x, emb_table, w_ih, w_hh, b_ih, b_hh, w_out, b_out)
    logits = jax.block_until_ready(logits)

    ref = reference_forward(x, emb_table, w_ih, w_hh, b_ih, b_hh, w_out, b_out)
    assert logits.shape == (B, O)
    # Tolerance loosened vs. the f32-only version: kernel uses bf16 MXU operands
    # (with f32 accumulation / f32 state) per the performance review.
    assert jnp.allclose(logits, ref, rtol=5e-2, atol=2e-2), (logits, ref)
    print("KERNEL_OK")
</pallas_src>

<mosaic_0001>
module attributes {stable_mosaic.version = 11 : i64} {
  func.func @lstm_classifier_kernel(%arg0: i32, %arg1: memref<8x8x16xbf16, #tpu.memory_space<vmem>>, %arg2: memref<8x1xi32, #tpu.memory_space<vmem>>, %arg3: memref<16x512xbf16, #tpu.memory_space<vmem>>, %arg4: memref<128x512xbf16, #tpu.memory_space<vmem>>, %arg5: memref<1x512xf32, #tpu.memory_space<vmem>>, %arg6: memref<128x128xf32, #tpu.memory_space<vmem>>, %arg7: memref<1x128xf32, #tpu.memory_space<vmem>>, %arg8: memref<8x128xf32, #tpu.memory_space<vmem>>, %arg9: memref<8x8x512xf32, #tpu.memory_space<vmem>>) attributes {dimension_semantics = [#tpu.dimension_semantics<parallel>], iteration_bounds = array<i64: 1>, scalar_prefetch = 0 : i64, scratch_operands = 1 : i64, tpu.core_type = #tpu.core_type<tc>, window_params = [{transform_indices = @transform_0, window_bounds = array<i64: 8, 8, 16>}, {transform_indices = @transform_1, window_bounds = array<i64: 8, 1>}, {pipeline_mode = #tpu.pipeline_mode<synchronous>, transform_indices = @transform_2, window_bounds = array<i64: 16, 512>}, {pipeline_mode = #tpu.pipeline_mode<synchronous>, transform_indices = @transform_3, window_bounds = array<i64: 128, 512>}, {pipeline_mode = #tpu.pipeline_mode<synchronous>, transform_indices = @transform_4, window_bounds = array<i64: 1, 512>}, {pipeline_mode = #tpu.pipeline_mode<synchronous>, transform_indices = @transform_5, window_bounds = array<i64: 128, 128>}, {pipeline_mode = #tpu.pipeline_mode<synchronous>, transform_indices = @transform_6, window_bounds = array<i64: 1, 128>}, {transform_indices = @transform_7, window_bounds = array<i64: 8, 128>}]} {
    %c0 = arith.constant 0 : index
    %c0_0 = arith.constant 0 : index
    %0 = vector.load %arg5[%c0, %c0_0] : memref<1x512xf32, #tpu.memory_space<vmem>>, vector<1x512xf32>
    %c0_1 = arith.constant 0 : index
    %c0_2 = arith.constant 0 : index
    %1 = vector.load %arg3[%c0_1, %c0_2] : memref<16x512xbf16, #tpu.memory_space<vmem>>, vector<16x512xbf16>
    %c0_3 = arith.constant 0 : index
    %c0_4 = arith.constant 0 : index
    %2 = vector.load %arg4[%c0_3, %c0_4] : memref<128x512xbf16, #tpu.memory_space<vmem>>, vector<128x512xbf16>
    %c0_5 = arith.constant 0 : index
    %c0_6 = arith.constant 0 : index
    %3 = vector.load %arg2[%c0_5, %c0_6] : memref<8x1xi32, #tpu.memory_space<vmem>>, vector<8x1xi32>
    %c0_7 = arith.constant 0 : index
    %c0_8 = arith.constant 0 : index
    %c0_9 = arith.constant 0 : index
    %4 = vector.load %arg1[%c0_7, %c0_8, %c0_9] : memref<8x8x16xbf16, #tpu.memory_space<vmem>>, vector<1x8x16xbf16>
    %5 = vector.shape_cast %4 : vector<1x8x16xbf16> to vector<8x16xbf16>
    %cst = arith.constant dense<0.000000e+00> : vector<8x512xf32>
    %6 = tpu.matmul %5, %1, %cst {dimension_numbers = #tpu.dot_dimension_numbers<[1], [0], [0], [1], [0, 0, 1, 1], [], []>} : vector<8x16xbf16>, vector<16x512xbf16>, vector<8x512xf32> -> vector<8x512xf32>
    %7 = vector.broadcast %0 : vector<1x512xf32> to vector<8x512xf32>
    %8 = arith.addf %6, %7 : vector<8x512xf32>
    %c0_10 = arith.constant 0 : index
    %c0_11 = arith.constant 0 : index
    %c0_12 = arith.constant 0 : index
    %9 = vector.load %arg9[%c0_10, %c0_11, %c0_12] : memref<8x8x512xf32, #tpu.memory_space<vmem>>, vector<1x8x512xf32>
    %10 = vector.shape_cast %9 : vector<1x8x512xf32> to vector<8x512xf32>
    %11 = vector.shape_cast %8 : vector<8x512xf32> to vector<1x8x512xf32>
    tpu.vector_store %arg9[%c0_10, %c0_11, %c0_12], %11 {strides = array<i32>} : memref<8x8x512xf32, #tpu.memory_space<vmem>>, vector<1x8x512xf32>,
    %c1 = arith.constant 1 : index
    %c0_13 = arith.constant 0 : index
    %c0_14 = arith.constant 0 : index
    %12 = vector.load %arg1[%c1, %c0_13, %c0_14] : memref<8x8x16xbf16, #tpu.memory_space<vmem>>, vector<1x8x16xbf16>
    %13 = vector.shape_cast %12 : vector<1x8x16xbf16> to vector<8x16xbf16>
    %cst_15 = arith.constant dense<0.000000e+00> : vector<8x512xf32>
    %14 = tpu.matmul %13, %1, %cst_15 {dimension_numbers = #tpu.dot_dimension_numbers<[1], [0], [0], [1], [0, 0, 1, 1], [], []>} : vector<8x16xbf16>, vector<16x512xbf16>, vector<8x512xf32> -> vector<8x512xf32>
    %15 = vector.broadcast %0 : vector<1x512xf32> to vector<8x512xf32>
    %16 = arith.addf %14, %15 : vector<8x512xf32>
    %c1_16 = arith.constant 1 : index
    %c0_17 = arith.constant 0 : index
    %c0_18 = arith.constant 0 : index
    %17 = vector.load %arg9[%c1_16, %c0_17, %c0_18] : memref<8x8x512xf32, #tpu.memory_space<vmem>>, vector<1x8x512xf32>
    %18 = vector.shape_cast %17 : vector<1x8x512xf32> to vector<8x512xf32>
    %19 = vector.shape_cast %16 : vector<8x512xf32> to vector<1x8x512xf32>
    tpu.vector_store %arg9[%c1_16, %c0_17, %c0_18], %19 {strides = array<i32>} : memref<8x8x512xf32, #tpu.memory_space<vmem>>, vector<1x8x512xf32>,
    %c2 = arith.constant 2 : index
    %c0_19 = arith.constant 0 : index
    %c0_20 = arith.constant 0 : index
    %20 = vector.load %arg1[%c2, %c0_19, %c0_20] : memref<8x8x16xbf16, #tpu.memory_space<vmem>>, vector<1x8x16xbf16>
    %21 = vector.shape_cast %20 : vector<1x8x16xbf16> to vector<8x16xbf16>
    %cst_21 = arith.constant dense<0.000000e+00> : vector<8x512xf32>
    %22 = tpu.matmul %21, %1, %cst_21 {dimension_numbers = #tpu.dot_dimension_numbers<[1], [0], [0], [1], [0, 0, 1, 1], [], []>} : vector<8x16xbf16>, vector<16x512xbf16>, vector<8x512xf32> -> vector<8x512xf32>
    %23 = vector.broadcast %0 : vector<1x512xf32> to vector<8x512xf32>
    %24 = arith.addf %22, %23 : vector<8x512xf32>
    %c2_22 = arith.constant 2 : index
    %c0_23 = arith.constant 0 : index
    %c0_24 = arith.constant 0 : index
    %25 = vector.load %arg9[%c2_22, %c0_23, %c0_24] : memref<8x8x512xf32, #tpu.memory_space<vmem>>, vector<1x8x512xf32>
    %26 = vector.shape_cast %25 : vector<1x8x512xf32> to vector<8x512xf32>
    %27 = vector.shape_cast %24 : vector<8x512xf32> to vector<1x8x512xf32>
    tpu.vector_store %arg9[%c2_22, %c0_23, %c0_24], %27 {strides = array<i32>} : memref<8x8x512xf32, #tpu.memory_space<vmem>>, vector<1x8x512xf32>,
    %c3 = arith.constant 3 : index
    %c0_25 = arith.constant 0 : index
    %c0_26 = arith.constant 0 : index
    %28 = vector.load %arg1[%c3, %c0_25, %c0_26] : memref<8x8x16xbf16, #tpu.memory_space<vmem>>, vector<1x8x16xbf16>
    %29 = vector.shape_cast %28 : vector<1x8x16xbf16> to vector<8x16xbf16>
    %cst_27 = arith.constant dense<0.000000e+00> : vector<8x512xf32>
    %30 = tpu.matmul %29, %1, %cst_27 {dimension_numbers = #tpu.dot_dimension_numbers<[1], [0], [0], [1], [0, 0, 1, 1], [], []>} : vector<8x16xbf16>, vector<16x512xbf16>, vector<8x512xf32> -> vector<8x512xf32>
    %31 = vector.broadcast %0 : vector<1x512xf32> to vector<8x512xf32>
    %32 = arith.addf %30, %31 : vector<8x512xf32>
    %c3_28 = arith.constant 3 : index
    %c0_29 = arith.constant 0 : index
    %c0_30 = arith.constant 0 : index
    %33 = vector.load %arg9[%c3_28, %c0_29, %c0_30] : memref<8x8x512xf32, #tpu.memory_space<vmem>>, vector<1x8x512xf32>
    %34 = vector.shape_cast %33 : vector<1x8x512xf32> to vector<8x512xf32>
    %35 = vector.shape_cast %32 : vector<8x512xf32> to vector<1x8x512xf32>
    tpu.vector_store %arg9[%c3_28, %c0_29, %c0_30], %35 {strides = array<i32>} : memref<8x8x512xf32, #tpu.memory_space<vmem>>, vector<1x8x512xf32>,
    %c4 = arith.constant 4 : index
    %c0_31 = arith.constant 0 : index
    %c0_32 = arith.constant 0 : index
    %36 = vector.load %arg1[%c4, %c0_31, %c0_32] : memref<8x8x16xbf16, #tpu.memory_space<vmem>>, vector<1x8x16xbf16>
    %37 = vector.shape_cast %36 : vector<1x8x16xbf16> to vector<8x16xbf16>
    %cst_33 = arith.constant dense<0.000000e+00> : vector<8x512xf32>
    %38 = tpu.matmul %37, %1, %cst_33 {dimension_numbers = #tpu.dot_dimension_numbers<[1], [0], [0], [1], [0, 0, 1, 1], [], []>} : vector<8x16xbf16>, vector<16x512xbf16>, vector<8x512xf32> -> vector<8x512xf32>
    %39 = vector.broadcast %0 : vector<1x512xf32> to vector<8x512xf32>
    %40 = arith.addf %38, %39 : vector<8x512xf32>
    %c4_34 = arith.constant 4 : index
    %c0_35 = arith.constant 0 : index
    %c0_36 = arith.constant 0 : index
    %41 = vector.load %arg9[%c4_34, %c0_35, %c0_36] : memref<8x8x512xf32, #tpu.memory_space<vmem>>, vector<1x8x512xf32>
    %42 = vector.shape_cast %41 : vector<1x8x512xf32> to vector<8x512xf32>
    %43 = vector.shape_cast %40 : vector<8x512xf32> to vector<1x8x512xf32>
    tpu.vector_store %arg9[%c4_34, %c0_35, %c0_36], %43 {strides = array<i32>} : memref<8x8x512xf32, #tpu.memory_space<vmem>>, vector<1x8x512xf32>,
    %c5 = arith.constant 5 : index
    %c0_37 = arith.constant 0 : index
    %c0_38 = arith.constant 0 : index
    %44 = vector.load %arg1[%c5, %c0_37, %c0_38] : memref<8x8x16xbf16, #tpu.memory_space<vmem>>, vector<1x8x16xbf16>
    %45 = vector.shape_cast %44 : vector<1x8x16xbf16> to vector<8x16xbf16>
    %cst_39 = arith.constant dense<0.000000e+00> : vector<8x512xf32>
    %46 = tpu.matmul %45, %1, %cst_39 {dimension_numbers = #tpu.dot_dimension_numbers<[1], [0], [0], [1], [0, 0, 1, 1], [], []>} : vector<8x16xbf16>, vector<16x512xbf16>, vector<8x512xf32> -> vector<8x512xf32>
    %47 = vector.broadcast %0 : vector<1x512xf32> to vector<8x512xf32>
    %48 = arith.addf %46, %47 : vector<8x512xf32>
    %c5_40 = arith.constant 5 : index
    %c0_41 = arith.constant 0 : index
    %c0_42 = arith.constant 0 : index
    %49 = vector.load %arg9[%c5_40, %c0_41, %c0_42] : memref<8x8x512xf32, #tpu.memory_space<vmem>>, vector<1x8x512xf32>
    %50 = vector.shape_cast %49 : vector<1x8x512xf32> to vector<8x512xf32>
    %51 = vector.shape_cast %48 : vector<8x512xf32> to vector<1x8x512xf32>
    tpu.vector_store %arg9[%c5_40, %c0_41, %c0_42], %51 {strides = array<i32>} : memref<8x8x512xf32, #tpu.memory_space<vmem>>, vector<1x8x512xf32>,
    %c6 = arith.constant 6 : index
    %c0_43 = arith.constant 0 : index
    %c0_44 = arith.constant 0 : index
    %52 = vector.load %arg1[%c6, %c0_43, %c0_44] : memref<8x8x16xbf16, #tpu.memory_space<vmem>>, vector<1x8x16xbf16>
    %53 = vector.shape_cast %52 : vector<1x8x16xbf16> to vector<8x16xbf16>
    %cst_45 = arith.constant dense<0.000000e+00> : vector<8x512xf32>
    %54 = tpu.matmul %53, %1, %cst_45 {dimension_numbers = #tpu.dot_dimension_numbers<[1], [0], [0], [1], [0, 0, 1, 1], [], []>} : vector<8x16xbf16>, vector<16x512xbf16>, vector<8x512xf32> -> vector<8x512xf32>
    %55 = vector.broadcast %0 : vector<1x512xf32> to vector<8x512xf32>
    %56 = arith.addf %54, %55 : vector<8x512xf32>
    %c6_46 = arith.constant 6 : index
    %c0_47 = arith.constant 0 : index
    %c0_48 = arith.constant 0 : index
    %57 = vector.load %arg9[%c6_46, %c0_47, %c0_48] : memref<8x8x512xf32, #tpu.memory_space<vmem>>, vector<1x8x512xf32>
    %58 = vector.shape_cast %57 : vector<1x8x512xf32> to vector<8x512xf32>
    %59 = vector.shape_cast %56 : vector<8x512xf32> to vector<1x8x512xf32>
    tpu.vector_store %arg9[%c6_46, %c0_47, %c0_48], %59 {strides = array<i32>} : memref<8x8x512xf32, #tpu.memory_space<vmem>>, vector<1x8x512xf32>,
    %c7 = arith.constant 7 : index
    %c0_49 = arith.constant 0 : index
    %c0_50 = arith.constant 0 : index
    %60 = vector.load %arg1[%c7, %c0_49, %c0_50] : memref<8x8x16xbf16, #tpu.memory_space<vmem>>, vector<1x8x16xbf16>
    %61 = vector.shape_cast %60 : vector<1x8x16xbf16> to vector<8x16xbf16>
    %cst_51 = arith.constant dense<0.000000e+00> : vector<8x512xf32>
    %62 = tpu.matmul %61, %1, %cst_51 {dimension_numbers = #tpu.dot_dimension_numbers<[1], [0], [0], [1], [0, 0, 1, 1], [], []>} : vector<8x16xbf16>, vector<16x512xbf16>, vector<8x512xf32> -> vector<8x512xf32>
    %63 = vector.broadcast %0 : vector<1x512xf32> to vector<8x512xf32>
    %64 = arith.addf %62, %63 : vector<8x512xf32>
    %c7_52 = arith.constant 7 : index
    %c0_53 = arith.constant 0 : index
    %c0_54 = arith.constant 0 : index
    %65 = vector.load %arg9[%c7_52, %c0_53, %c0_54] : memref<8x8x512xf32, #tpu.memory_space<vmem>>, vector<1x8x512xf32>
    %66 = vector.shape_cast %65 : vector<1x8x512xf32> to vector<8x512xf32>
    %67 = vector.shape_cast %64 : vector<8x512xf32> to vector<1x8x512xf32>
    tpu.vector_store %arg9[%c7_52, %c0_53, %c0_54], %67 {strides = array<i32>} : memref<8x8x512xf32, #tpu.memory_space<vmem>>, vector<1x8x512xf32>,
    %cst_55 = arith.constant 0.000000e+00 : f32
    %68 = vector.broadcast %cst_55 : f32 to vector<8x128xf32>
    %cst_56 = arith.constant 0.000000e+00 : f32
    %69 = vector.broadcast %cst_56 : f32 to vector<8x128xf32>
    %cst_57 = arith.constant 0.000000e+00 : f32
    %70 = vector.broadcast %cst_57 : f32 to vector<8x128xf32>
    %c0_58 = arith.constant 0 : index
    %c0_59 = arith.constant 0 : index
    %c0_60 = arith.constant 0 : index
    %71 = vector.load %arg9[%c0_58, %c0_59, %c0_60] : memref<8x8x512xf32, #tpu.memory_space<vmem>>, vector<1x8x512xf32>
    %72 = vector.shape_cast %71 : vector<1x8x512xf32> to vector<8x512xf32>
    %73 = arith.truncf %68 : vector<8x128xf32> to vector<8x128xbf16>
    %cst_61 = arith.constant dense<0.000000e+00> : vector<8x512xf32>
    %74 = tpu.matmul %73, %2, %cst_61 {dimension_numbers = #tpu.dot_dimension_numbers<[1], [0], [0], [1], [0, 0, 1, 1], [], []>} : vector<8x128xbf16>, vector<128x512xbf16>, vector<8x512xf32> -> vector<8x512xf32>
    %75 = arith.addf %72, %74 : vector<8x512xf32>
    %76 = vector.extract_strided_slice %75 {offsets = [0, 0], sizes = [8, 384], strides = [1, 1]} : vector<8x512xf32> to vector<8x384xf32>
    %77 = arith.negf %76 : vector<8x384xf32>
    %78 = math.exp %77 : vector<8x384xf32>
    %cst_62 = arith.constant 1.000000e+00 : f32
    %79 = vector.broadcast %cst_62 : f32 to vector<8x384xf32>
    %80 = arith.addf %79, %78 : vector<8x384xf32>
    %81 = arith.divf %79, %80 : vector<8x384xf32>
    %82 = vector.extract_strided_slice %81 {offsets = [0, 0], sizes = [8, 128], strides = [1, 1]} : vector<8x384xf32> to vector<8x128xf32>
    %83 = vector.extract_strided_slice %81 {offsets = [0, 128], sizes = [8, 128], strides = [1, 1]} : vector<8x384xf32> to vector<8x128xf32>
    %84 = vector.extract_strided_slice %81 {offsets = [0, 256], sizes = [8, 128], strides = [1, 1]} : vector<8x384xf32> to vector<8x128xf32>
    %85 = vector.extract_strided_slice %75 {offsets = [0, 384], sizes = [8, 128], strides = [1, 1]} : vector<8x512xf32> to vector<8x128xf32>
    %86 = math.tanh %85 : vector<8x128xf32>
    %87 = arith.mulf %83, %69 : vector<8x128xf32>
    %88 = arith.mulf %82, %86 : vector<8x128xf32>
    %89 = arith.addf %87, %88 : vector<8x128xf32>
    %90 = math.tanh %89 : vector<8x128xf32>
    %91 = arith.mulf %84, %90 : vector<8x128xf32>
    %c0_i32 = arith.constant 0 : i32
    %92 = vector.broadcast %c0_i32 : i32 to vector<8x1xi32>
    %93 = arith.cmpi eq, %3, %92 : vector<8x1xi32>
    %94 = vector.shape_cast %93 : vector<8x1xi1> to vector<8x1xi1>
    %95 = vector.broadcast %94 : vector<8x1xi1> to vector<8x128xi1>
    %96 = arith.select %95, %91, %70 : vector<8x128xi1>, vector<8x128xf32>
    %c1_63 = arith.constant 1 : index
    %c0_64 = arith.constant 0 : index
    %c0_65 = arith.constant 0 : index
    %97 = vector.load %arg9[%c1_63, %c0_64, %c0_65] : memref<8x8x512xf32, #tpu.memory_space<vmem>>, vector<1x8x512xf32>
    %98 = vector.shape_cast %97 : vector<1x8x512xf32> to vector<8x512xf32>
    %99 = arith.truncf %91 : vector<8x128xf32> to vector<8x128xbf16>
    %cst_66 = arith.constant dense<0.000000e+00> : vector<8x512xf32>
    %100 = tpu.matmul %99, %2, %cst_66 {dimension_numbers = #tpu.dot_dimension_numbers<[1], [0], [0], [1], [0, 0, 1, 1], [], []>} : vector<8x128xbf16>, vector<128x512xbf16>, vector<8x512xf32> -> vector<8x512xf32>
    %101 = arith.addf %98, %100 : vector<8x512xf32>
    %102 = vector.extract_strided_slice %101 {offsets = [0, 0], sizes = [8, 384], strides = [1, 1]} : vector<8x512xf32> to vector<8x384xf32>
    %103 = arith.negf %102 : vector<8x384xf32>
    %104 = math.exp %103 : vector<8x384xf32>
    %cst_67 = arith.constant 1.000000e+00 : f32
    %105 = vector.broadcast %cst_67 : f32 to vector<8x384xf32>
    %106 = arith.addf %105, %104 : vector<8x384xf32>
    %107 = arith.divf %105, %106 : vector<8x384xf32>
    %108 = vector.extract_strided_slice %107 {offsets = [0, 0], sizes = [8, 128], strides = [1, 1]} : vector<8x384xf32> to vector<8x128xf32>
    %109 = vector.extract_strided_slice %107 {offsets = [0, 128], sizes = [8, 128], strides = [1, 1]} : vector<8x384xf32> to vector<8x128xf32>
    %110 = vector.extract_strided_slice %107 {offsets = [0, 256], sizes = [8, 128], strides = [1, 1]} : vector<8x384xf32> to vector<8x128xf32>
    %111 = vector.extract_strided_slice %101 {offsets = [0, 384], sizes = [8, 128], strides = [1, 1]} : vector<8x512xf32> to vector<8x128xf32>
    %112 = math.tanh %111 : vector<8x128xf32>
    %113 = arith.mulf %109, %89 : vector<8x128xf32>
    %114 = arith.mulf %108, %112 : vector<8x128xf32>
    %115 = arith.addf %113, %114 : vector<8x128xf32>
    %116 = math.tanh %115 : vector<8x128xf32>
    %117 = arith.mulf %110, %116 : vector<8x128xf32>
    %c1_i32 = arith.constant 1 : i32
    %118 = vector.broadcast %c1_i32 : i32 to vector<8x1xi32>
    %119 = arith.cmpi eq, %3, %118 : vector<8x1xi32>
    %120 = vector.shape_cast %119 : vector<8x1xi1> to vector<8x1xi1>
    %121 = vector.broadcast %120 : vector<8x1xi1> to vector<8x128xi1>
    %122 = arith.select %121, %117, %96 : vector<8x128xi1>, vector<8x128xf32>
    %c2_68 = arith.constant 2 : index
    %c0_69 = arith.constant 0 : index
    %c0_70 = arith.constant 0 : index
    %123 = vector.load %arg9[%c2_68, %c0_69, %c0_70] : memref<8x8x512xf32, #tpu.memory_space<vmem>>, vector<1x8x512xf32>
    %124 = vector.shape_cast %123 : vector<1x8x512xf32> to vector<8x512xf32>
    %125 = arith.truncf %117 : vector<8x128xf32> to vector<8x128xbf16>
    %cst_71 = arith.constant dense<0.000000e+00> : vector<8x512xf32>
    %126 = tpu.matmul %125, %2, %cst_71 {dimension_numbers = #tpu.dot_dimension_numbers<[1], [0], [0], [1], [0, 0, 1, 1], [], []>} : vector<8x128xbf16>, vector<128x512xbf16>, vector<8x512xf32> -> vector<8x512xf32>
    %127 = arith.addf %124, %126 : vector<8x512xf32>
    %128 = vector.extract_strided_slice %127 {offsets = [0, 0], sizes = [8, 384], strides = [1, 1]} : vector<8x512xf32> to vector<8x384xf32>
    %129 = arith.negf %128 : vector<8x384xf32>
    %130 = math.exp %129 : vector<8x384xf32>
    %cst_72 = arith.constant 1.000000e+00 : f32
    %131 = vector.broadcast %cst_72 : f32 to vector<8x384xf32>
    %132 = arith.addf %131, %130 : vector<8x384xf32>
    %133 = arith.divf %131, %132 : vector<8x384xf32>
    %134 = vector.extract_strided_slice %133 {offsets = [0, 0], sizes = [8, 128], strides = [1, 1]} : vector<8x384xf32> to vector<8x128xf32>
    %135 = vector.extract_strided_slice %133 {offsets = [0, 128], sizes = [8, 128], strides = [1, 1]} : vector<8x384xf32> to vector<8x128xf32>
    %136 = vector.extract_strided_slice %133 {offsets = [0, 256], sizes = [8, 128], strides = [1, 1]} : vector<8x384xf32> to vector<8x128xf32>
    %137 = vector.extract_strided_slice %127 {offsets = [0, 384], sizes = [8, 128], strides = [1, 1]} : vector<8x512xf32> to vector<8x128xf32>
    %138 = math.tanh %137 : vector<8x128xf32>
    %139 = arith.mulf %135, %115 : vector<8x128xf32>
    %140 = arith.mulf %134, %138 : vector<8x128xf32>
    %141 = arith.addf %139, %140 : vector<8x128xf32>
    %142 = math.tanh %141 : vector<8x128xf32>
    %143 = arith.mulf %136, %142 : vector<8x128xf32>
    %c2_i32 = arith.constant 2 : i32
    %144 = vector.broadcast %c2_i32 : i32 to vector<8x1xi32>
    %145 = arith.cmpi eq, %3, %144 : vector<8x1xi32>
    %146 = vector.shape_cast %145 : vector<8x1xi1> to vector<8x1xi1>
    %147 = vector.broadcast %146 : vector<8x1xi1> to vector<8x128xi1>
    %148 = arith.select %147, %143, %122 : vector<8x128xi1>, vector<8x128xf32>
    %c3_73 = arith.constant 3 : index
    %c0_74 = arith.constant 0 : index
    %c0_75 = arith.constant 0 : index
    %149 = vector.load %arg9[%c3_73, %c0_74, %c0_75] : memref<8x8x512xf32, #tpu.memory_space<vmem>>, vector<1x8x512xf32>
    %150 = vector.shape_cast %149 : vector<1x8x512xf32> to vector<8x512xf32>
    %151 = arith.truncf %143 : vector<8x128xf32> to vector<8x128xbf16>
    %cst_76 = arith.constant dense<0.000000e+00> : vector<8x512xf32>
    %152 = tpu.matmul %151, %2, %cst_76 {dimension_numbers = #tpu.dot_dimension_numbers<[1], [0], [0], [1], [0, 0, 1, 1], [], []>} : vector<8x128xbf16>, vector<128x512xbf16>, vector<8x512xf32> -> vector<8x512xf32>
    %153 = arith.addf %150, %152 : vector<8x512xf32>
    %154 = vector.extract_strided_slice %153 {offsets = [0, 0], sizes = [8, 384], strides = [1, 1]} : vector<8x512xf32> to vector<8x384xf32>
    %155 = arith.negf %154 : vector<8x384xf32>
    %156 = math.exp %155 : vector<8x384xf32>
    %cst_77 = arith.constant 1.000000e+00 : f32
    %157 = vector.broadcast %cst_77 : f32 to vector<8x384xf32>
    %158 = arith.addf %157, %156 : vector<8x384xf32>
    %159 = arith.divf %157, %158 : vector<8x384xf32>
    %160 = vector.extract_strided_slice %159 {offsets = [0, 0], sizes = [8, 128], strides = [1, 1]} : vector<8x384xf32> to vector<8x128xf32>
    %161 = vector.extract_strided_slice %159 {offsets = [0, 128], sizes = [8, 128], strides = [1, 1]} : vector<8x384xf32> to vector<8x128xf32>
    %162 = vector.extract_strided_slice %159 {offsets = [0, 256], sizes = [8, 128], strides = [1, 1]} : vector<8x384xf32> to vector<8x128xf32>
    %163 = vector.extract_strided_slice %153 {offsets = [0, 384], sizes = [8, 128], strides = [1, 1]} : vector<8x512xf32> to vector<8x128xf32>
    %164 = math.tanh %163 : vector<8x128xf32>
    %165 = arith.mulf %161, %141 : vector<8x128xf32>
    %166 = arith.mulf %160, %164 : vector<8x128xf32>
    %167 = arith.addf %165, %166 : vector<8x128xf32>
    %168 = math.tanh %167 : vector<8x128xf32>
    %169 = arith.mulf %162, %168 : vector<8x128xf32>
    %c3_i32 = arith.constant 3 : i32
    %170 = vector.broadcast %c3_i32 : i32 to vector<8x1xi32>
    %171 = arith.cmpi eq, %3, %170 : vector<8x1xi32>
    %172 = vector.shape_cast %171 : vector<8x1xi1> to vector<8x1xi1>
    %173 = vector.broadcast %172 : vector<8x1xi1> to vector<8x128xi1>
    %174 = arith.select %173, %169, %148 : vector<8x128xi1>, vector<8x128xf32>
    %c4_78 = arith.constant 4 : index
    %c0_79 = arith.constant 0 : index
    %c0_80 = arith.constant 0 : index
    %175 = vector.load %arg9[%c4_78, %c0_79, %c0_80] : memref<8x8x512xf32, #tpu.memory_space<vmem>>, vector<1x8x512xf32>
    %176 = vector.shape_cast %175 : vector<1x8x512xf32> to vector<8x512xf32>
    %177 = arith.truncf %169 : vector<8x128xf32> to vector<8x128xbf16>
    %cst_81 = arith.constant dense<0.000000e+00> : vector<8x512xf32>
    %178 = tpu.matmul %177, %2, %cst_81 {dimension_numbers = #tpu.dot_dimension_numbers<[1], [0], [0], [1], [0, 0, 1, 1], [], []>} : vector<8x128xbf16>, vector<128x512xbf16>, vector<8x512xf32> -> vector<8x512xf32>
    %179 = arith.addf %176, %178 : vector<8x512xf32>
    %180 = vector.extract_strided_slice %179 {offsets = [0, 0], sizes = [8, 384], strides = [1, 1]} : vector<8x512xf32> to vector<8x384xf32>
    %181 = arith.negf %180 : vector<8x384xf32>
    %182 = math.exp %181 : vector<8x384xf32>
    %cst_82 = arith.constant 1.000000e+00 : f32
    %183 = vector.broadcast %cst_82 : f32 to vector<8x384xf32>
    %184 = arith.addf %183, %182 : vector<8x384xf32>
    %185 = arith.divf %183, %184 : vector<8x384xf32>
    %186 = vector.extract_strided_slice %185 {offsets = [0, 0], sizes = [8, 128], strides = [1, 1]} : vector<8x384xf32> to vector<8x128xf32>
    %187 = vector.extract_strided_slice %185 {offsets = [0, 128], sizes = [8, 128], strides = [1, 1]} : vector<8x384xf32> to vector<8x128xf32>
    %188 = vector.extract_strided_slice %185 {offsets = [0, 256], sizes = [8, 128], strides = [1, 1]} : vector<8x384xf32> to vector<8x128xf32>
    %189 = vector.extract_strided_slice %179 {offsets = [0, 384], sizes = [8, 128], strides = [1, 1]} : vector<8x512xf32> to vector<8x128xf32>
    %190 = math.tanh %189 : vector<8x128xf32>
    %191 = arith.mulf %187, %167 : vector<8x128xf32>
    %192 = arith.mulf %186, %190 : vector<8x128xf32>
    %193 = arith.addf %191, %192 : vector<8x128xf32>
    %194 = math.tanh %193 : vector<8x128xf32>
    %195 = arith.mulf %188, %194 : vector<8x128xf32>
    %c4_i32 = arith.constant 4 : i32
    %196 = vector.broadcast %c4_i32 : i32 to vector<8x1xi32>
    %197 = arith.cmpi eq, %3, %196 : vector<8x1xi32>
    %198 = vector.shape_cast %197 : vector<8x1xi1> to vector<8x1xi1>
    %199 = vector.broadcast %198 : vector<8x1xi1> to vector<8x128xi1>
    %200 = arith.select %199, %195, %174 : vector<8x128xi1>, vector<8x128xf32>
    %c5_83 = arith.constant 5 : index
    %c0_84 = arith.constant 0 : index
    %c0_85 = arith.constant 0 : index
    %201 = vector.load %arg9[%c5_83, %c0_84, %c0_85] : memref<8x8x512xf32, #tpu.memory_space<vmem>>, vector<1x8x512xf32>
    %202 = vector.shape_cast %201 : vector<1x8x512xf32> to vector<8x512xf32>
    %203 = arith.truncf %195 : vector<8x128xf32> to vector<8x128xbf16>
    %cst_86 = arith.constant dense<0.000000e+00> : vector<8x512xf32>
    %204 = tpu.matmul %203, %2, %cst_86 {dimension_numbers = #tpu.dot_dimension_numbers<[1], [0], [0], [1], [0, 0, 1, 1], [], []>} : vector<8x128xbf16>, vector<128x512xbf16>, vector<8x512xf32> -> vector<8x512xf32>
    %205 = arith.addf %202, %204 : vector<8x512xf32>
    %206 = vector.extract_strided_slice %205 {offsets = [0, 0], sizes = [8, 384], strides = [1, 1]} : vector<8x512xf32> to vector<8x384xf32>
    %207 = arith.negf %206 : vector<8x384xf32>
    %208 = math.exp %207 : vector<8x384xf32>
    %cst_87 = arith.constant 1.000000e+00 : f32
    %209 = vector.broadcast %cst_87 : f32 to vector<8x384xf32>
    %210 = arith.addf %209, %208 : vector<8x384xf32>
    %211 = arith.divf %209, %210 : vector<8x384xf32>
    %212 = vector.extract_strided_slice %211 {offsets = [0, 0], sizes = [8, 128], strides = [1, 1]} : vector<8x384xf32> to vector<8x128xf32>
    %213 = vector.extract_strided_slice %211 {offsets = [0, 128], sizes = [8, 128], strides = [1, 1]} : vector<8x384xf32> to vector<8x128xf32>
    %214 = vector.extract_strided_slice %211 {offsets = [0, 256], sizes = [8, 128], strides = [1, 1]} : vector<8x384xf32> to vector<8x128xf32>
    %215 = vector.extract_strided_slice %205 {offsets = [0, 384], sizes = [8, 128], strides = [1, 1]} : vector<8x512xf32> to vector<8x128xf32>
    %216 = math.tanh %215 : vector<8x128xf32>
    %217 = arith.mulf %213, %193 : vector<8x128xf32>
    %218 = arith.mulf %212, %216 : vector<8x128xf32>
    %219 = arith.addf %217, %218 : vector<8x128xf32>
    %220 = math.tanh %219 : vector<8x128xf32>
    %221 = arith.mulf %214, %220 : vector<8x128xf32>
    %c5_i32 = arith.constant 5 : i32
    %222 = vector.broadcast %c5_i32 : i32 to vector<8x1xi32>
    %223 = arith.cmpi eq, %3, %222 : vector<8x1xi32>
    %224 = vector.shape_cast %223 : vector<8x1xi1> to vector<8x1xi1>
    %225 = vector.broadcast %224 : vector<8x1xi1> to vector<8x128xi1>
    %226 = arith.select %225, %221, %200 : vector<8x128xi1>, vector<8x128xf32>
    %c6_88 = arith.constant 6 : index
    %c0_89 = arith.constant 0 : index
    %c0_90 = arith.constant 0 : index
    %227 = vector.load %arg9[%c6_88, %c0_89, %c0_90] : memref<8x8x512xf32, #tpu.memory_space<vmem>>, vector<1x8x512xf32>
    %228 = vector.shape_cast %227 : vector<1x8x512xf32> to vector<8x512xf32>
    %229 = arith.truncf %221 : vector<8x128xf32> to vector<8x128xbf16>
    %cst_91 = arith.constant dense<0.000000e+00> : vector<8x512xf32>
    %230 = tpu.matmul %229, %2, %cst_91 {dimension_numbers = #tpu.dot_dimension_numbers<[1], [0], [0], [1], [0, 0, 1, 1], [], []>} : vector<8x128xbf16>, vector<128x512xbf16>, vector<8x512xf32> -> vector<8x512xf32>
    %231 = arith.addf %228, %230 : vector<8x512xf32>
    %232 = vector.extract_strided_slice %231 {offsets = [0, 0], sizes = [8, 384], strides = [1, 1]} : vector<8x512xf32> to vector<8x384xf32>
    %233 = arith.negf %232 : vector<8x384xf32>
    %234 = math.exp %233 : vector<8x384xf32>
    %cst_92 = arith.constant 1.000000e+00 : f32
    %235 = vector.broadcast %cst_92 : f32 to vector<8x384xf32>
    %236 = arith.addf %235, %234 : vector<8x384xf32>
    %237 = arith.divf %235, %236 : vector<8x384xf32>
    %238 = vector.extract_strided_slice %237 {offsets = [0, 0], sizes = [8, 128], strides = [1, 1]} : vector<8x384xf32> to vector<8x128xf32>
    %239 = vector.extract_strided_slice %237 {offsets = [0, 128], sizes = [8, 128], strides = [1, 1]} : vector<8x384xf32> to vector<8x128xf32>
    %240 = vector.extract_strided_slice %237 {offsets = [0, 256], sizes = [8, 128], strides = [1, 1]} : vector<8x384xf32> to vector<8x128xf32>
    %241 = vector.extract_strided_slice %231 {offsets = [0, 384], sizes = [8, 128], strides = [1, 1]} : vector<8x512xf32> to vector<8x128xf32>
    %242 = math.tanh %241 : vector<8x128xf32>
    %243 = arith.mulf %239, %219 : vector<8x128xf32>
    %244 = arith.mulf %238, %242 : vector<8x128xf32>
    %245 = arith.addf %243, %244 : vector<8x128xf32>
    %246 = math.tanh %245 : vector<8x128xf32>
    %247 = arith.mulf %240, %246 : vector<8x128xf32>
    %c6_i32 = arith.constant 6 : i32
    %248 = vector.broadcast %c6_i32 : i32 to vector<8x1xi32>
    %249 = arith.cmpi eq, %3, %248 : vector<8x1xi32>
    %250 = vector.shape_cast %249 : vector<8x1xi1> to vector<8x1xi1>
    %251 = vector.broadcast %250 : vector<8x1xi1> to vector<8x128xi1>
    %252 = arith.select %251, %247, %226 : vector<8x128xi1>, vector<8x128xf32>
    %c7_93 = arith.constant 7 : index
    %c0_94 = arith.constant 0 : index
    %c0_95 = arith.constant 0 : index
    %253 = vector.load %arg9[%c7_93, %c0_94, %c0_95] : memref<8x8x512xf32, #tpu.memory_space<vmem>>, vector<1x8x512xf32>
    %254 = vector.shape_cast %253 : vector<1x8x512xf32> to vector<8x512xf32>
    %255 = arith.truncf %247 : vector<8x128xf32> to vector<8x128xbf16>
    %cst_96 = arith.constant dense<0.000000e+00> : vector<8x512xf32>
    %256 = tpu.matmul %255, %2, %cst_96 {dimension_numbers = #tpu.dot_dimension_numbers<[1], [0], [0], [1], [0, 0, 1, 1], [], []>} : vector<8x128xbf16>, vector<128x512xbf16>, vector<8x512xf32> -> vector<8x512xf32>
    %257 = arith.addf %254, %256 : vector<8x512xf32>
    %258 = vector.extract_strided_slice %257 {offsets = [0, 0], sizes = [8, 384], strides = [1, 1]} : vector<8x512xf32> to vector<8x384xf32>
    %259 = arith.negf %258 : vector<8x384xf32>
    %260 = math.exp %259 : vector<8x384xf32>
    %cst_97 = arith.constant 1.000000e+00 : f32
    %261 = vector.broadcast %cst_97 : f32 to vector<8x384xf32>
    %262 = arith.addf %261, %260 : vector<8x384xf32>
    %263 = arith.divf %261, %262 : vector<8x384xf32>
    %264 = vector.extract_strided_slice %263 {offsets = [0, 0], sizes = [8, 128], strides = [1, 1]} : vector<8x384xf32> to vector<8x128xf32>
    %265 = vector.extract_strided_slice %263 {offsets = [0, 128], sizes = [8, 128], strides = [1, 1]} : vector<8x384xf32> to vector<8x128xf32>
    %266 = vector.extract_strided_slice %263 {offsets = [0, 256], sizes = [8, 128], strides = [1, 1]} : vector<8x384xf32> to vector<8x128xf32>
    %267 = vector.extract_strided_slice %257 {offsets = [0, 384], sizes = [8, 128], strides = [1, 1]} : vector<8x512xf32> to vector<8x128xf32>
    %268 = math.tanh %267 : vector<8x128xf32>
    %269 = arith.mulf %265, %245 : vector<8x128xf32>
    %270 = arith.mulf %264, %268 : vector<8x128xf32>
    %271 = arith.addf %269, %270 : vector<8x128xf32>
    %272 = math.tanh %271 : vector<8x128xf32>
    %273 = arith.mulf %266, %272 : vector<8x128xf32>
    %c7_i32 = arith.constant 7 : i32
    %274 = vector.broadcast %c7_i32 : i32 to vector<8x1xi32>
    %275 = arith.cmpi eq, %3, %274 : vector<8x1xi32>
    %276 = vector.shape_cast %275 : vector<8x1xi1> to vector<8x1xi1>
    %277 = vector.broadcast %276 : vector<8x1xi1> to vector<8x128xi1>
    %278 = arith.select %277, %273, %252 : vector<8x128xi1>, vector<8x128xf32>
    %c0_98 = arith.constant 0 : index
    %c0_99 = arith.constant 0 : index
    %279 = vector.load %arg6[%c0_98, %c0_99] : memref<128x128xf32, #tpu.memory_space<vmem>>, vector<128x128xf32>
    %cst_100 = arith.constant dense<0.000000e+00> : vector<8x128xf32>
    %280 = tpu.matmul %278, %279, %cst_100 {dimension_numbers = #tpu.dot_dimension_numbers<[1], [0], [0], [1], [0, 0, 1, 1], [], []>} : vector<8x128xf32>, vector<128x128xf32>, vector<8x128xf32> -> vector<8x128xf32>
    %c0_101 = arith.constant 0 : index
    %c0_102 = arith.constant 0 : index
    %281 = vector.load %arg7[%c0_101, %c0_102] : memref<1x128xf32, #tpu.memory_space<vmem>>, vector<1x128xf32>
    %282 = vector.broadcast %281 : vector<1x128xf32> to vector<8x128xf32>
    %283 = arith.addf %280, %282 : vector<8x128xf32>
    %c0_103 = arith.constant 0 : index
    %c0_104 = arith.constant 0 : index
    %284 = vector.load %arg8[%c0_103, %c0_104] : memref<8x128xf32, #tpu.memory_space<vmem>>, vector<8x128xf32>
    tpu.vector_store %arg8[%c0_103, %c0_104], %283 {strides = array<i32>} : memref<8x128xf32, #tpu.memory_space<vmem>>, vector<8x128xf32>,
    return
  }
  func.func @transform_0(%arg0: i32) -> (i32, i32, i32) {
    %c0_i32 = arith.constant 0 : i32
    %c0_i32_0 = arith.constant 0 : i32
    %c0_i32_1 = arith.constant 0 : i32
    return %c0_i32, %arg0, %c0_i32_0 : i32, i32, i32
  }
  func.func @transform_1(%arg0: i32) -> (i32, i32) {
    %c0_i32 = arith.constant 0 : i32
    %c0_i32_0 = arith.constant 0 : i32
    return %arg0, %c0_i32 : i32, i32
  }
  func.func @transform_2(%arg0: i32) -> (i32, i32) {
    %c0_i32 = arith.constant 0 : i32
    %c0_i32_0 = arith.constant 0 : i32
    %c0_i32_1 = arith.constant 0 : i32
    return %c0_i32, %c0_i32_0 : i32, i32
  }
  func.func @transform_3(%arg0: i32) -> (i32, i32) {
    %c0_i32 = arith.constant 0 : i32
    %c0_i32_0 = arith.constant 0 : i32
    %c0_i32_1 = arith.constant 0 : i32
    return %c0_i32, %c0_i32_0 : i32, i32
  }
  func.func @transform_4(%arg0: i32) -> (i32, i32) {
    %c0_i32 = arith.constant 0 : i32
    %c0_i32_0 = arith.constant 0 : i32
    %c0_i32_1 = arith.constant 0 : i32
    return %c0_i32, %c0_i32_0 : i32, i32
  }
  func.func @transform_5(%arg0: i32) -> (i32, i32) {
    %c0_i32 = arith.constant 0 : i32
    %c0_i32_0 = arith.constant 0 : i32
    %c0_i32_1 = arith.constant 0 : i32
    return %c0_i32, %c0_i32_0 : i32, i32
  }
  func.func @transform_6(%arg0: i32) -> (i32, i32) {
    %c0_i32 = arith.constant 0 : i32
    %c0_i32_0 = arith.constant 0 : i32
    %c0_i32_1 = arith.constant 0 : i32
    return %c0_i32, %c0_i32_0 : i32, i32
  }
  func.func @transform_7(%arg0: i32) -> (i32, i32) {
    %c0_i32 = arith.constant 0 : i32
    %c0_i32_0 = arith.constant 0 : i32
    return %arg0, %c0_i32 : i32, i32
  }
}

</mosaic_0001>

<llo_original>
// kernel: tpu_custom_call.1
$region0: #{tpu_custom_call.1}
  #allocation0 [shape = 'u32[]', space=smem, size = 0x4, offset = 0x4, fixed_abs, tag = 'smem constant byte address 0x4 - core index']
  #allocation1 [shape = 'u32[144,128]{1,0:T(1,128)}', space=vmem, size = 0x12000, scoped, tag = 'internal scratch']
  #allocation2 [shape = 'f32[8,8,512]{2,1,0:T(8,128)}', space=vmem, size = 0x20000, scoped, tag = 'scratch operand']
  %s0 = inlined_call_operand.hbm [shape: bf16[8,8,16], index: 0, kind: input, shape index: {}]
  %s1 = inlined_call_operand.vmem [shape: s32[8,1], index: 1, kind: input, shape index: {}]
  %s2 = inlined_call_operand.hbm [shape: bf16[16,512], index: 2, kind: input, shape index: {}]
  %s3 = inlined_call_operand.hbm [shape: bf16[128,512], index: 3, kind: input, shape index: {}]
  %s4 = inlined_call_operand.vmem [shape: f32[1,512], index: 4, kind: input, shape index: {}]
  %s5 = inlined_call_operand.hbm [shape: f32[128,128], index: 5, kind: input, shape index: {}]
  %s6 = inlined_call_operand.vmem [shape: f32[1,128], index: 6, kind: input, shape index: {}]
  %s7 = inlined_call_operand.hbm [shape: f32[8,128], index: 7, kind: output, shape index: {}]
  %s8 = sld [smem:[#allocation0]]
  $region54: #{tpu_custom_call.1} parent=0
    _
  %s10 = ssub.s32 1, %s8
  %s11 = scalar_select 0, %s10, %s8
  $region1: #{tpu_custom_call.1} parent=0
    #allocation3 [shape = 'u8[16384]{0}', space=vmem, size = 0x4000, scoped, tag = 'input window, operand 0, single buffered']
    #allocation4 [shape = 's32[1]{0}', space=sflag, size = 0x4, scoped, tag = 'scoped memory for tpu_custom_call.1']
    #allocation5 [shape = 's32[1]{0}', space=sflag, size = 0x4, scoped, tag = 'scoped memory for tpu_custom_call.1']
    #allocation6 [shape = 'u8[16384]{0}', space=vmem, size = 0x4000, scoped, tag = 'input window, operand 2, single buffered']
    #allocation7 [shape = 's32[1]{0}', space=sflag, size = 0x4, scoped, tag = 'scoped memory for tpu_custom_call.1']
    #allocation8 [shape = 'u8[131072]{0}', space=vmem, size = 0x20000, scoped, tag = 'input window, operand 3, single buffered']
    #allocation9 [shape = 'u8[65536]{0}', space=vmem, size = 0x10000, scoped, tag = 'input window, operand 5, single buffered']
    #allocation10 [shape = 's32[1]{0}', space=sflag, size = 0x4, scoped, tag = 'scoped memory for tpu_custom_call.1']
    #allocation11 [shape = 'u8[4096]{0}', space=vmem, size = 0x1000, scoped, tag = 'output window, operand 0, single buffered']
    %12 = vsyncpa [#allocation4], 0
    %13 = vsyncpa [#allocation7], 0
    %14 = vsyncpa [#allocation10], 0
    %15 = vsyncpa [#allocation5], 0
    // Predicated region
    $region2: #{tpu_custom_call.1} parent=1 // pred_check
      _
    $region3: #{tpu_custom_call.1} parent=1 // pred_check_branch
      %17 = sbr.rel (0) target = $region5
    $region4: #{tpu_custom_call.1} parent=1 // pred_region
      %s19 = ssub.s32 512, 512
      %20 = vsyncadd [#allocation4], %s19
      %s21 = sshll.u32 [#allocation3], 4
      %s22 = int_to_ptr.vmem [resolvable:$true] %s21
      %27 = dma.hbm_to_vmem [thread:$0]  %s0, 512, %s22, [#allocation4], 64, 64, 4
    $region5: #{tpu_custom_call.1} parent=1 // pred_fallthru
      _
    // Predicated region
    $region6: #{tpu_custom_call.1} parent=1 // pred_check
      _
    $region7: #{tpu_custom_call.1} parent=1 // pred_check_branch
      %29 = sbr.rel (0) target = $region9
    $region8: #{tpu_custom_call.1} parent=1 // pred_region
      _
    $region9: #{tpu_custom_call.1} parent=1 // pred_fallthru
      _
    // Predicated region
    $region10: #{tpu_custom_call.1} parent=1 // pred_check
      _
    $region11: #{tpu_custom_call.1} parent=1 // pred_check_branch
      %31 = sbr.rel (0) target = $region13
    $region12: #{tpu_custom_call.1} parent=1 // pred_region
      %s33 = ssub.s32 512, 512
      %34 = vsyncadd [#allocation7], %s33
      %s35 = sshll.u32 [#allocation6], 4
      %s36 = int_to_ptr.vmem [resolvable:$true] %s35
      %41 = dma.hbm_to_vmem [thread:$0]  %s2, 512, %s36, [#allocation7], 256, 256, 16
    $region13: #{tpu_custom_call.1} parent=1 // pred_fallthru
      _
    // Predicated region
    $region14: #{tpu_custom_call.1} parent=1 // pred_check
      _
    $region15: #{tpu_custom_call.1} parent=1 // pred_check_branch
      %43 = sbr.rel (0) target = $region17
    $region16: #{tpu_custom_call.1} parent=1 // pred_region
      %s45 = ssub.s32 4096, 4096
      %46 = vsyncadd [#allocation7], %s45
      %s47 = sshll.u32 [#allocation8], 4
      %s48 = int_to_ptr.vmem [resolvable:$true] %s47
      %53 = dma.hbm_to_vmem [thread:$0]  %s3, 4096, %s48, [#allocation7], 256, 256, 16
    $region17: #{tpu_custom_call.1} parent=1 // pred_fallthru
      _
    // Predicated region
    $region18: #{tpu_custom_call.1} parent=1 // pred_check
      _
    $region19: #{tpu_custom_call.1} parent=1 // pred_check_branch
      %55 = sbr.rel (0) target = $region21
    $region20: #{tpu_custom_call.1} parent=1 // pred_region
      _
    $region21: #{tpu_custom_call.1} parent=1 // pred_fallthru
      _
    // Predicated region
    $region22: #{tpu_custom_call.1} parent=1 // pred_check
      _
    $region23: #{tpu_custom_call.1} parent=1 // pred_check_branch
      %57 = sbr.rel (0) target = $region25
    $region24: #{tpu_custom_call.1} parent=1 // pred_region
      %s59 = ssub.s32 2048, 2048
      %60 = vsyncadd [#allocation10], %s59
      %s61 = sshll.u32 [#allocation9], 4
      %s62 = int_to_ptr.vmem [resolvable:$true] %s61
      %67 = dma.hbm_to_vmem [thread:$0]  %s5, 2048, %s62, [#allocation10], 128, 128, 8
    $region25: #{tpu_custom_call.1} parent=1 // pred_fallthru
      _
    // Predicated region
    $region26: #{tpu_custom_call.1} parent=1 // pred_check
      _
    $region27: #{tpu_custom_call.1} parent=1 // pred_check_branch
      %69 = sbr.rel (0) target = $region29
    $region28: #{tpu_custom_call.1} parent=1 // pred_region
      _
    $region29: #{tpu_custom_call.1} parent=1 // pred_fallthru
      _
    // Predicated region
    $region30: #{tpu_custom_call.1} parent=1 // pred_check
      _
    $region31: #{tpu_custom_call.1} parent=1 // pred_check_branch
      %71 = sbr.rel (0) target = $region33
    $region32: #{tpu_custom_call.1} parent=1 // pred_region
      %72 = dma.done [#allocation4], 512
    $region33: #{tpu_custom_call.1} parent=1 // pred_fallthru
      _
    // Predicated region
    $region34: #{tpu_custom_call.1} parent=1 // pred_check
      _
    $region35: #{tpu_custom_call.1} parent=1 // pred_check_branch
      %74 = sbr.rel (0) target = $region37
    $region36: #{tpu_custom_call.1} parent=1 // pred_region
      %75 = dma.done [#allocation7], 512
    $region37: #{tpu_custom_call.1} parent=1 // pred_fallthru
      _
    // Predicated region
    $region38: #{tpu_custom_call.1} parent=1 // pred_check
      _
    $region39: #{tpu_custom_call.1} parent=1 // pred_check_branch
      %77 = sbr.rel (0) target = $region41
    $region40: #{tpu_custom_call.1} parent=1 // pred_region
      %78 = dma.done [#allocation7], 4096
    $region41: #{tpu_custom_call.1} parent=1 // pred_fallthru
      _
    // Predicated region
    $region42: #{tpu_custom_call.1} parent=1 // pred_check
      _
    $region43: #{tpu_custom_call.1} parent=1 // pred_check_branch
      %80 = sbr.rel (0) target = $region45
    $region44: #{tpu_custom_call.1} parent=1 // pred_region
      %81 = dma.done [#allocation10], 2048
    $region45: #{tpu_custom_call.1} parent=1 // pred_fallthru
      _
    %v83 = vld [vmem:[%s4] sm:$0xf]
    %v84 = vld [vmem:[#allocation6] sm:$0xff]
    %v85 = vld [vmem:[#allocation6 + $0x8] sm:$0xff]
    %v86 = vld [vmem:[#allocation6 + $0x10] sm:$0xff]
    %v87 = vld [vmem:[#allocation6 + $0x18] sm:$0xff]
    %v88 = vld [vmem:[#allocation8] sm:$0xff]
    %v89 = vld [vmem:[#allocation8 + $0x8] sm:$0xff]
    %v90 = vld [vmem:[#allocation8 + $0x10] sm:$0xff]
    %v91 = vld [vmem:[#allocation8 + $0x18] sm:$0xff]
    %v92 = vld [vmem:[#allocation8 + $0x20] sm:$0xff]
    %v93 = vld [vmem:[#allocation8 + $0x28] sm:$0xff]
    %v94 = vld [vmem:[#allocation8 + $0x30] sm:$0xff]
    %v95 = vld [vmem:[#allocation8 + $0x38] sm:$0xff]
    %v96 = vld [vmem:[#allocation8 + $0x40] sm:$0xff]
    %v97 = vld [vmem:[#allocation8 + $0x48] sm:$0xff]
    %v98 = vld [vmem:[#allocation8 + $0x50] sm:$0xff]
    %v99 = vld [vmem:[#allocation8 + $0x58] sm:$0xff]
    %v100 = vld [vmem:[#allocation8 + $0x60] sm:$0xff]
    %v101 = vld [vmem:[#allocation8 + $0x68] sm:$0xff]
    %v102 = vld [vmem:[#allocation8 + $0x70] sm:$0xff]
    %v103 = vld [vmem:[#allocation8 + $0x78] sm:$0xff]
    %v104 = vld [vmem:[#allocation8 + $0x80] sm:$0xff]
    %v105 = vld [vmem:[#allocation8 + $0x88] sm:$0xff]
    %v106 = vld [vmem:[#allocation8 + $0x90] sm:$0xff]
    %v107 = vld [vmem:[#allocation8 + $0x98] sm:$0xff]
    %v108 = vld [vmem:[#allocation8 + $0xa0] sm:$0xff]
    %v109 = vld [vmem:[#allocation8 + $0xa8] sm:$0xff]
    %v110 = vld [vmem:[#allocation8 + $0xb0] sm:$0xff]
    %v111 = vld [vmem:[#allocation8 + $0xb8] sm:$0xff]
    %v112 = vld [vmem:[#allocation8 + $0xc0] sm:$0xff]
    %v113 = vld [vmem:[#allocation8 + $0xc8] sm:$0xff]
    %v114 = vld [vmem:[#allocation8 + $0xd0] sm:$0xff]
    %v115 = vld [vmem:[#allocation8 + $0xd8] sm:$0xff]
    %v116 = vld [vmem:[#allocation8 + $0xe0] sm:$0xff]
    %v117 = vld [vmem:[#allocation8 + $0xe8] sm:$0xff]
    %v118 = vld [vmem:[#allocation8 + $0xf0] sm:$0xff]
    %v119 = vld [vmem:[#allocation8 + $0xf8] sm:$0xff]
    %v120 = vld [vmem:[%s1] sm:$0xff]
    %v121 = vld [vmem:[#allocation3] sm:$0xf]
    %v123 = vlaneseq
    %v124 = vshrl.u32 %v123, 7
    %v125 = vsub.s32 0, %v124
    %v126 = vrot.slane %v83, %v125
    %v127 = vlaneseq
    %v128 = vshrl.u32 %v127, 7
    %v129 = vsub.s32 1, %v128
    %v130 = vrot.slane %v83, %v129
    %v131 = vlaneseq
    %v132 = vshrl.u32 %v131, 7
    %v133 = vsub.s32 2, %v132
    %v134 = vrot.slane %v83, %v133
    %v135 = vlaneseq
    %v136 = vshrl.u32 %v135, 7
    %v137 = vsub.s32 3, %v136
    %v138 = vrot.slane %v83, %v137
    %v147 = vunpack.c.l.b16 %v84
    %v148 = vunpack.c.h.b16 %v84
    %v149 = vunpack.c.l.b16 %v85
    %v150 = vunpack.c.h.b16 %v85
    %v151 = vunpack.c.l.b16 %v86
    %v152 = vunpack.c.h.b16 %v86
    %v153 = vunpack.c.l.b16 %v87
    %v154 = vunpack.c.h.b16 %v87
    %v155 = vpack.c.b16 %v151, %v147
    %v156 = vpack.c.b16 %v152, %v148
    %v157 = vpack.c.b16 %v153, %v149
    %v158 = vpack.c.b16 %v154, %v150
    %vm163 = vcmask 130048
    %v165 = vsel %vm163, %v121, 0
    %167 = vmatprep.subr.bf16.mxu0 %v156
    %168 = vmatpush1.bf16.msra.mxu0 %v155
    %169 = vmatprep.subr.bf16.mxu0 0
    %170 = vmatpush1.bf16.msra.mxu0 0
    %171 = vmatprep.subr.bf16.mxu0 0
    %172 = vmatpush1.bf16.msra.mxu0 0
    %173 = vmatprep.subr.bf16.mxu0 0
    %174 = vmatpush1.bf16.msra.mxu0 0
    %175 = vmatprep.subr.bf16.mxu0 0
    %176 = vmatpush1.bf16.msra.mxu0 0
    %177 = vmatprep.subr.bf16.mxu0 0
    %178 = vmatpush1.bf16.msra.mxu0 0
    %179 = vmatprep.subr.bf16.mxu0 0
    %180 = vmatpush1.bf16.msra.mxu0 0
    %181 = vmatprep.subr.bf16.mxu0 0
    %182 = vmatpush1.bf16.msra.mxu0 0
    %183 = vmatprep.subr.bf16.mxu0 0
    %184 = vmatpush1.bf16.msra.mxu0 0
    %185 = vmatprep.subr.bf16.mxu0 0
    %186 = vmatpush1.bf16.msra.mxu0 0
    %187 = vmatprep.subr.bf16.mxu0 0
    %188 = vmatpush1.bf16.msra.mxu0 0
    %189 = vmatprep.subr.bf16.mxu0 0
    %190 = vmatpush1.bf16.msra.mxu0 0
    %191 = vmatprep.subr.bf16.mxu0 0
    %192 = vmatpush1.bf16.msra.mxu0 0
    %193 = vmatprep.subr.bf16.mxu0 0
    %194 = vmatpush1.bf16.msra.mxu0 0
    %195 = vmatprep.subr.bf16.mxu0 0
    %196 = vmatpush1.bf16.msra.mxu0 0
    %197 = vmatprep.subr.bf16.mxu0 0
    %198 = vmatpush1.bf16.msra.mxu0 0
    %199 = vmatprep.mubr.bf16.mxu0 0
    %200 = vmatmul.mubr.bf16.gmra.mrb[0].mxu0 %v165
    %v201 = vpop.f32.mrb[0].mxu0
    %v202 = vadd.f32 %v126, %v201
    %v203 = vpop.f32.mrb[0].mxu0
    %v204 = vadd.f32 %v130, %v203
    %v205 = vpop.f32.mrb[0].mxu0
    %v206 = vpop.f32.mrb[0].mxu0
    %207 = vdwg.mxu0
    %208 = vmatprep.subr.bf16.mxu0 %v158
    %209 = vmatpush1.bf16.msra.mxu0 %v157
    %210 = vmatprep.subr.bf16.mxu0 0
    %211 = vmatpush1.bf16.msra.mxu0 0
    %212 = vmatprep.subr.bf16.mxu0 0
    %213 = vmatpush1.bf16.msra.mxu0 0
    %214 = vmatprep.subr.bf16.mxu0 0
    %215 = vmatpush1.bf16.msra.mxu0 0
    %216 = vmatprep.subr.bf16.mxu0 0
    %217 = vmatpush1.bf16.msra.mxu0 0
    %218 = vmatprep.subr.bf16.mxu0 0
    %219 = vmatpush1.bf16.msra.mxu0 0
    %220 = vmatprep.subr.bf16.mxu0 0
    %221 = vmatpush1.bf16.msra.mxu0 0
    %222 = vmatprep.subr.bf16.mxu0 0
    %223 = vmatpush1.bf16.msra.mxu0 0
    %224 = vmatprep.subr.bf16.mxu0 0
    %225 = vmatpush1.bf16.msra.mxu0 0
    %226 = vmatprep.subr.bf16.mxu0 0
    %227 = vmatpush1.bf16.msra.mxu0 0
    %228 = vmatprep.subr.bf16.mxu0 0
    %229 = vmatpush1.bf16.msra.mxu0 0
    %230 = vmatprep.subr.bf16.mxu0 0
    %231 = vmatpush1.bf16.msra.mxu0 0
    %232 = vmatprep.subr.bf16.mxu0 0
    %233 = vmatpush1.bf16.msra.mxu0 0
    %234 = vmatprep.subr.bf16.mxu0 0
    %235 = vmatpush1.bf16.msra.mxu0 0
    %236 = vmatprep.subr.bf16.mxu0 0
    %237 = vmatpush1.bf16.msra.mxu0 0
    %238 = vmatprep.subr.bf16.mxu0 0
    %239 = vmatpush1.bf16.msra.mxu0 0
    %240 = vmatprep.mubr.bf16.mxu0 0
    %241 = vmatmul.mubr.bf16.gmra.mrb[0].mxu0 %v165
    %v242 = vpop.f32.mrb[0].mxu0
    %v243 = vadd.f32 %v134, %v242
    %v244 = vpop.f32.mrb[0].mxu0
    %v245 = vadd.f32 %v138, %v244
    %v246 = vpop.f32.mrb[0].mxu0
    %v247 = vpop.f32.mrb[0].mxu0
    %248 = vdwg.mxu0
    %249 = vst [vmem:[#allocation2] sm:$0xff] %v202
    %250 = vst [vmem:[#allocation2 + $0x8] sm:$0xff] %v204
    %251 = vst [vmem:[#allocation2 + $0x10] sm:$0xff] %v243
    %252 = vst [vmem:[#allocation2 + $0x18] sm:$0xff] %v245
    %s253 = scalar_lea.vmem [#allocation3], 4
    %v254 = vld [vmem:[%s253] sm:$0xf]
    %v256 = vsel %vm163, %v254, 0
    %258 = vmatprep.subr.bf16.mxu0 %v156
    %259 = vmatpush1.bf16.msra.mxu0 %v155
    %260 = vmatprep.subr.bf16.mxu0 0
    %261 = vmatpush1.bf16.msra.mxu0 0
    %262 = vmatprep.subr.bf16.mxu0 0
    %263 = vmatpush1.bf16.msra.mxu0 0
    %264 = vmatprep.subr.bf16.mxu0 0
    %265 = vmatpush1.bf16.msra.mxu0 0
    %266 = vmatprep.subr.bf16.mxu0 0
    %267 = vmatpush1.bf16.msra.mxu0 0
    %268 = vmatprep.subr.bf16.mxu0 0
    %269 = vmatpush1.bf16.msra.mxu0 0
    %270 = vmatprep.subr.bf16.mxu0 0
    %271 = vmatpush1.bf16.msra.mxu0 0
    %272 = vmatprep.subr.bf16.mxu0 0
    %273 = vmatpush1.bf16.msra.mxu0 0
    %274 = vmatprep.subr.bf16.mxu0 0
    %275 = vmatpush1.bf16.msra.mxu0 0
    %276 = vmatprep.subr.bf16.mxu0 0
    %277 = vmatpush1.bf16.msra.mxu0 0
    %278 = vmatprep.subr.bf16.mxu0 0
    %279 = vmatpush1.bf16.msra.mxu0 0
    %280 = vmatprep.subr.bf16.mxu0 0
    %281 = vmatpush1.bf16.msra.mxu0 0
    %282 = vmatprep.subr.bf16.mxu0 0
    %283 = vmatpush1.bf16.msra.mxu0 0
    %284 = vmatprep.subr.bf16.mxu0 0
    %285 = vmatpush1.bf16.msra.mxu0 0
    %286 = vmatprep.subr.bf16.mxu0 0
    %287 = vmatpush1.bf16.msra.mxu0 0
    %288 = vmatprep.subr.bf16.mxu0 0
    %289 = vmatpush1.bf16.msra.mxu0 0
    %290 = vmatprep.mubr.bf16.mxu0 0
    %291 = vmatmul.mubr.bf16.gmra.mrb[0].mxu0 %v256
    %v292 = vpop.f32.mrb[0].mxu0
    %v293 = vadd.f32 %v126, %v292
    %v294 = vpop.f32.mrb[0].mxu0
    %v295 = vadd.f32 %v130, %v294
    %v296 = vpop.f32.mrb[0].mxu0
    %v297 = vpop.f32.mrb[0].mxu0
    %298 = vdwg.mxu0
    %299 = vmatprep.subr.bf16.mxu0 %v158
    %300 = vmatpush1.bf16.msra.mxu0 %v157
    %301 = vmatprep.subr.bf16.mxu0 0
    %302 = vmatpush1.bf16.msra.mxu0 0
    %303 = vmatprep.subr.bf16.mxu0 0
    %304 = vmatpush1.bf16.msra.mxu0 0
    %305 = vmatprep.subr.bf16.mxu0 0
    %306 = vmatpush1.bf16.msra.mxu0 0
    %307 = vmatprep.subr.bf16.mxu0 0
    %308 = vmatpush1.bf16.msra.mxu0 0
    %309 = vmatprep.subr.bf16.mxu0 0
    %310 = vmatpush1.bf16.msra.mxu0 0
    %311 = vmatprep.subr.bf16.mxu0 0
    %312 = vmatpush1.bf16.msra.mxu0 0
    %313 = vmatprep.subr.bf16.mxu0 0
    %314 = vmatpush1.bf16.msra.mxu0 0
    %315 = vmatprep.subr.bf16.mxu0 0
    %316 = vmatpush1.bf16.msra.mxu0 0
    %317 = vmatprep.subr.bf16.mxu0 0
    %318 = vmatpush1.bf16.msra.mxu0 0
    %319 = vmatprep.subr.bf16.mxu0 0
    %320 = vmatpush1.bf16.msra.mxu0 0
    %321 = vmatprep.subr.bf16.mxu0 0
    %322 = vmatpush1.bf16.msra.mxu0 0
    %323 = vmatprep.subr.bf16.mxu0 0
    %324 = vmatpush1.bf16.msra.mxu0 0
    %325 = vmatprep.subr.bf16.mxu0 0
    %326 = vmatpush1.bf16.msra.mxu0 0
    %327 = vmatprep.subr.bf16.mxu0 0
    %328 = vmatpush1.bf16.msra.mxu0 0
    %329 = vmatprep.subr.bf16.mxu0 0
    %330 = vmatpush1.bf16.msra.mxu0 0
    %331 = vmatprep.mubr.bf16.mxu0 0
    %332 = vmatmul.mubr.bf16.gmra.mrb[0].mxu0 %v256
    %v333 = vpop.f32.mrb[0].mxu0
    %v334 = vadd.f32 %v134, %v333
    %v335 = vpop.f32.mrb[0].mxu0
    %v336 = vadd.f32 %v138, %v335
    %v337 = vpop.f32.mrb[0].mxu0
    %v338 = vpop.f32.mrb[0].mxu0
    %339 = vdwg.mxu0
    %s340 = scalar_lea.vmem [#allocation2], 32
    %341 = vst [vmem:[%s340] sm:$0xff] %v293
    %342 = vst [vmem:[%s340 + $0x8] sm:$0xff] %v295
    %343 = vst [vmem:[%s340 + $0x10] sm:$0xff] %v334
    %344 = vst [vmem:[%s340 + $0x18] sm:$0xff] %v336
    %s345 = scalar_lea.vmem [#allocation3], 8
    %v346 = vld [vmem:[%s345] sm:$0xf]
    %v348 = vsel %vm163, %v346, 0
    %350 = vmatprep.subr.bf16.mxu0 %v156
    %351 = vmatpush1.bf16.msra.mxu0 %v155
    %352 = vmatprep.subr.bf16.mxu0 0
    %353 = vmatpush1.bf16.msra.mxu0 0
    %354 = vmatprep.subr.bf16.mxu0 0
    %355 = vmatpush1.bf16.msra.mxu0 0
    %356 = vmatprep.subr.bf16.mxu0 0
    %357 = vmatpush1.bf16.msra.mxu0 0
    %358 = vmatprep.subr.bf16.mxu0 0
    %359 = vmatpush1.bf16.msra.mxu0 0
    %360 = vmatprep.subr.bf16.mxu0 0
    %361 = vmatpush1.bf16.msra.mxu0 0
    %362 = vmatprep.subr.bf16.mxu0 0
    %363 = vmatpush1.bf16.msra.mxu0 0
    %364 = vmatprep.subr.bf16.mxu0 0
    %365 = vmatpush1.bf16.msra.mxu0 0
    %366 = vmatprep.subr.bf16.mxu0 0
    %367 = vmatpush1.bf16.msra.mxu0 0
    %368 = vmatprep.subr.bf16.mxu0 0
    %369 = vmatpush1.bf16.msra.mxu0 0
    %370 = vmatprep.subr.bf16.mxu0 0
    %371 = vmatpush1.bf16.msra.mxu0 0
    %372 = vmatprep.subr.bf16.mxu0 0
    %373 = vmatpush1.bf16.msra.mxu0 0
    %374 = vmatprep.subr.bf16.mxu0 0
    %375 = vmatpush1.bf16.msra.mxu0 0
    %376 = vmatprep.subr.bf16.mxu0 0
    %377 = vmatpush1.bf16.msra.mxu0 0
    %378 = vmatprep.subr.bf16.mxu0 0
    %379 = vmatpush1.bf16.msra.mxu0 0
    %380 = vmatprep.subr.bf16.mxu0 0
    %381 = vmatpush1.bf16.msra.mxu0 0
    %382 = vmatprep.mubr.bf16.mxu0 0
    %383 = vmatmul.mubr.bf16.gmra.mrb[0].mxu0 %v348
    %v384 = vpop.f32.mrb[0].mxu0
    %v385 = vadd.f32 %v126, %v384
    %v386 = vpop.f32.mrb[0].mxu0
    %v387 = vadd.f32 %v130, %v386
    %v388 = vpop.f32.mrb[0].mxu0
    %v389 = vpop.f32.mrb[0].mxu0
    %390 = vdwg.mxu0
    %391 = vmatprep.subr.bf16.mxu0 %v158
    %392 = vmatpush1.bf16.msra.mxu0 %v157
    %393 = vmatprep.subr.bf16.mxu0 0
    %394 = vmatpush1.bf16.msra.mxu0 0
    %395 = vmatprep.subr.bf16.mxu0 0
    %396 = vmatpush1.bf16.msra.mxu0 0
    %397 = vmatprep.subr.bf16.mxu0 0
    %398 = vmatpush1.bf16.msra.mxu0 0
    %399 = vmatprep.subr.bf16.mxu0 0
    %400 = vmatpush1.bf16.msra.mxu0 0
    %401 = vmatprep.subr.bf16.mxu0 0
    %402 = vmatpush1.bf16.msra.mxu0 0
    %403 = vmatprep.subr.bf16.mxu0 0
    %404 = vmatpush1.bf16.msra.mxu0 0
    %405 = vmatprep.subr.bf16.mxu0 0
    %406 = vmatpush1.bf16.msra.mxu0 0
    %407 = vmatprep.subr.bf16.mxu0 0
    %408 = vmatpush1.bf16.msra.mxu0 0
    %409 = vmatprep.subr.bf16.mxu0 0
    %410 = vmatpush1.bf16.msra.mxu0 0
    %411 = vmatprep.subr.bf16.mxu0 0
    %412 = vmatpush1.bf16.msra.mxu0 0
    %413 = vmatprep.subr.bf16.mxu0 0
    %414 = vmatpush1.bf16.msra.mxu0 0
    %415 = vmatprep.subr.bf16.mxu0 0
    %416 = vmatpush1.bf16.msra.mxu0 0
    %417 = vmatprep.subr.bf16.mxu0 0
    %418 = vmatpush1.bf16.msra.mxu0 0
    %419 = vmatprep.subr.bf16.mxu0 0
    %420 = vmatpush1.bf16.msra.mxu0 0
    %421 = vmatprep.subr.bf16.mxu0 0
    %422 = vmatpush1.bf16.msra.mxu0 0
    %423 = vmatprep.mubr.bf16.mxu0 0
    %424 = vmatmul.mubr.bf16.gmra.mrb[0].mxu0 %v348
    %v425 = vpop.f32.mrb[0].mxu0
    %v426 = vadd.f32 %v134, %v425
    %v427 = vpop.f32.mrb[0].mxu0
    %v428 = vadd.f32 %v138, %v427
    %v429 = vpop.f32.mrb[0].mxu0
    %v430 = vpop.f32.mrb[0].mxu0
    %431 = vdwg.mxu0
    %s432 = scalar_lea.vmem [#allocation2], 64
    %433 = vst [vmem:[%s432] sm:$0xff] %v385
    %434 = vst [vmem:[%s432 + $0x8] sm:$0xff] %v387
    %435 = vst [vmem:[%s432 + $0x10] sm:$0xff] %v426
    %436 = vst [vmem:[%s432 + $0x18] sm:$0xff] %v428
    %s437 = scalar_lea.vmem [#allocation3], 12
    %v438 = vld [vmem:[%s437] sm:$0xf]
    %v440 = vsel %vm163, %v438, 0
    %442 = vmatprep.subr.bf16.mxu0 %v156
    %443 = vmatpush1.bf16.msra.mxu0 %v155
    %444 = vmatprep.subr.bf16.mxu0 0
    %445 = vmatpush1.bf16.msra.mxu0 0
    %446 = vmatprep.subr.bf16.mxu0 0
    %447 = vmatpush1.bf16.msra.mxu0 0
    %448 = vmatprep.subr.bf16.mxu0 0
    %449 = vmatpush1.bf16.msra.mxu0 0
    %450 = vmatprep.subr.bf16.mxu0 0
    %451 = vmatpush1.bf16.msra.mxu0 0
    %452 = vmatprep.subr.bf16.mxu0 0
    %453 = vmatpush1.bf16.msra.mxu0 0
    %454 = vmatprep.subr.bf16.mxu0 0
    %455 = vmatpush1.bf16.msra.mxu0 0
    %456 = vmatprep.subr.bf16.mxu0 0
    %457 = vmatpush1.bf16.msra.mxu0 0
    %458 = vmatprep.subr.bf16.mxu0 0
    %459 = vmatpush1.bf16.msra.mxu0 0
    %460 = vmatprep.subr.bf16.mxu0 0
    %461 = vmatpush1.bf16.msra.mxu0 0
    %462 = vmatprep.subr.bf16.mxu0 0
    %463 = vmatpush1.bf16.msra.mxu0 0
    %464 = vmatprep.subr.bf16.mxu0 0
    %465 = vmatpush1.bf16.msra.mxu0 0
    %466 = vmatprep.subr.bf16.mxu0 0
    %467 = vmatpush1.bf16.msra.mxu0 0
    %468 = vmatprep.subr.bf16.mxu0 0
    %469 = vmatpush1.bf16.msra.mxu0 0
    %470 = vmatprep.subr.bf16.mxu0 0
    %471 = vmatpush1.bf16.msra.mxu0 0
    %472 = vmatprep.subr.bf16.mxu0 0
    %473 = vmatpush1.bf16.msra.mxu0 0
    %474 = vmatprep.mubr.bf16.mxu0 0
    %475 = vmatmul.mubr.bf16.gmra.mrb[0].mxu0 %v440
    %v476 = vpop.f32.mrb[0].mxu0
    %v477 = vadd.f32 %v126, %v476
    %v478 = vpop.f32.mrb[0].mxu0
    %v479 = vadd.f32 %v130, %v478
    %v480 = vpop.f32.mrb[0].mxu0
    %v481 = vpop.f32.mrb[0].mxu0
    %482 = vdwg.mxu0
    %483 = vmatprep.subr.bf16.mxu0 %v158
    %484 = vmatpush1.bf16.msra.mxu0 %v157
    %485 = vmatprep.subr.bf16.mxu0 0
    %486 = vmatpush1.bf16.msra.mxu0 0
    %487 = vmatprep.subr.bf16.mxu0 0
    %488 = vmatpush1.bf16.msra.mxu0 0
    %489 = vmatprep.subr.bf16.mxu0 0
    %490 = vmatpush1.bf16.msra.mxu0 0
    %491 = vmatprep.subr.bf16.mxu0 0
    %492 = vmatpush1.bf16.msra.mxu0 0
    %493 = vmatprep.subr.bf16.mxu0 0
    %494 = vmatpush1.bf16.msra.mxu0 0
    %495 = vmatprep.subr.bf16.mxu0 0
    %496 = vmatpush1.bf16.msra.mxu0 0
    %497 = vmatprep.subr.bf16.mxu0 0
    %498 = vmatpush1.bf16.msra.mxu0 0
    %499 = vmatprep.subr.bf16.mxu0 0
    %500 = vmatpush1.bf16.msra.mxu0 0
    %501 = vmatprep.subr.bf16.mxu0 0
    %502 = vmatpush1.bf16.msra.mxu0 0
    %503 = vmatprep.subr.bf16.mxu0 0
    %504 = vmatpush1.bf16.msra.mxu0 0
    %505 = vmatprep.subr.bf16.mxu0 0
    %506 = vmatpush1.bf16.msra.mxu0 0
    %507 = vmatprep.subr.bf16.mxu0 0
    %508 = vmatpush1.bf16.msra.mxu0 0
    %509 = vmatprep.subr.bf16.mxu0 0
    %510 = vmatpush1.bf16.msra.mxu0 0
    %511 = vmatprep.subr.bf16.mxu0 0
    %512 = vmatpush1.bf16.msra.mxu0 0
    %513 = vmatprep.subr.bf16.mxu0 0
    %514 = vmatpush1.bf16.msra.mxu0 0
    %515 = vmatprep.mubr.bf16.mxu0 0
    %516 = vmatmul.mubr.bf16.gmra.mrb[0].mxu0 %v440
    %v517 = vpop.f32.mrb[0].mxu0
    %v518 = vadd.f32 %v134, %v517
    %v519 = vpop.f32.mrb[0].mxu0
    %v520 = vadd.f32 %v138, %v519
    %v521 = vpop.f32.mrb[0].mxu0
    %v522 = vpop.f32.mrb[0].mxu0
    %523 = vdwg.mxu0
    %s524 = scalar_lea.vmem [#allocation2], 96
    %525 = vst [vmem:[%s524] sm:$0xff] %v477
    %526 = vst [vmem:[%s524 + $0x8] sm:$0xff] %v479
    %527 = vst [vmem:[%s524 + $0x10] sm:$0xff] %v518
    %528 = vst [vmem:[%s524 + $0x18] sm:$0xff] %v520
    %s529 = scalar_lea.vmem [#allocation3], 16
    %v530 = vld [vmem:[%s529] sm:$0xf]
    %v532 = vsel %vm163, %v530, 0
    %534 = vmatprep.subr.bf16.mxu0 %v156
    %535 = vmatpush1.bf16.msra.mxu0 %v155
    %536 = vmatprep.subr.bf16.mxu0 0
    %537 = vmatpush1.bf16.msra.mxu0 0
    %538 = vmatprep.subr.bf16.mxu0 0
    %539 = vmatpush1.bf16.msra.mxu0 0
    %540 = vmatprep.subr.bf16.mxu0 0
    %541 = vmatpush1.bf16.msra.mxu0 0
    %542 = vmatprep.subr.bf16.mxu0 0
    %543 = vmatpush1.bf16.msra.mxu0 0
    %544 = vmatprep.subr.bf16.mxu0 0
    %545 = vmatpush1.bf16.msra.mxu0 0
    %546 = vmatprep.subr.bf16.mxu0 0
    %547 = vmatpush1.bf16.msra.mxu0 0
    %548 = vmatprep.subr.bf16.mxu0 0
    %549 = vmatpush1.bf16.msra.mxu0 0
    %550 = vmatprep.subr.bf16.mxu0 0
    %551 = vmatpush1.bf16.msra.mxu0 0
    %552 = vmatprep.subr.bf16.mxu0 0
    %553 = vmatpush1.bf16.msra.mxu0 0
    %554 = vmatprep.subr.bf16.mxu0 0
    %555 = vmatpush1.bf16.msra.mxu0 0
    %556 = vmatprep.subr.bf16.mxu0 0
    %557 = vmatpush1.bf16.msra.mxu0 0
    %558 = vmatprep.subr.bf16.mxu0 0
    %559 = vmatpush1.bf16.msra.mxu0 0
    %560 = vmatprep.subr.bf16.mxu0 0
    %561 = vmatpush1.bf16.msra.mxu0 0
    %562 = vmatprep.subr.bf16.mxu0 0
    %563 = vmatpush1.bf16.msra.mxu0 0
    %564 = vmatprep.subr.bf16.mxu0 0
    %565 = vmatpush1.bf16.msra.mxu0 0
    %566 = vmatprep.mubr.bf16.mxu0 0
    %567 = vmatmul.mubr.bf16.gmra.mrb[0].mxu0 %v532
    %v568 = vpop.f32.mrb[0].mxu0
    %v569 = vadd.f32 %v126, %v568
    %v570 = vpop.f32.mrb[0].mxu0
    %v571 = vadd.f32 %v130, %v570
    %v572 = vpop.f32.mrb[0].mxu0
    %v573 = vpop.f32.mrb[0].mxu0
    %574 = vdwg.mxu0
    %575 = vmatprep.subr.bf16.mxu0 %v158
    %576 = vmatpush1.bf16.msra.mxu0 %v157
    %577 = vmatprep.subr.bf16.mxu0 0
    %578 = vmatpush1.bf16.msra.mxu0 0
    %579 = vmatprep.subr.bf16.mxu0 0
    %580 = vmatpush1.bf16.msra.mxu0 0
    %581 = vmatprep.subr.bf16.mxu0 0
    %582 = vmatpush1.bf16.msra.mxu0 0
    %583 = vmatprep.subr.bf16.mxu0 0
    %584 = vmatpush1.bf16.msra.mxu0 0
    %585 = vmatprep.subr.bf16.mxu0 0
    %586 = vmatpush1.bf16.msra.mxu0 0
    %587 = vmatprep.subr.bf16.mxu0 0
    %588 = vmatpush1.bf16.msra.mxu0 0
    %589 = vmatprep.subr.bf16.mxu0 0
    %590 = vmatpush1.bf16.msra.mxu0 0
    %591 = vmatprep.subr.bf16.mxu0 0
    %592 = vmatpush1.bf16.msra.mxu0 0
    %593 = vmatprep.subr.bf16.mxu0 0
    %594 = vmatpush1.bf16.msra.mxu0 0
    %595 = vmatprep.subr.bf16.mxu0 0
    %596 = vmatpush1.bf16.msra.mxu0 0
    %597 = vmatprep.subr.bf16.mxu0 0
    %598 = vmatpush1.bf16.msra.mxu0 0
    %599 = vmatprep.subr.bf16.mxu0 0
    %600 = vmatpush1.bf16.msra.mxu0 0
    %601 = vmatprep.subr.bf16.mxu0 0
    %602 = vmatpush1.bf16.msra.mxu0 0
    %603 = vmatprep.subr.bf16.mxu0 0
    %604 = vmatpush1.bf16.msra.mxu0 0
    %605 = vmatprep.subr.bf16.mxu0 0
    %606 = vmatpush1.bf16.msra.mxu0 0
    %607 = vmatprep.mubr.bf16.mxu0 0
    %608 = vmatmul.mubr.bf16.gmra.mrb[0].mxu0 %v532
    %v609 = vpop.f32.mrb[0].mxu0
    %v610 = vadd.f32 %v134, %v609
    %v611 = vpop.f32.mrb[0].mxu0
    %v612 = vadd.f32 %v138, %v611
    %v613 = vpop.f32.mrb[0].mxu0
    %v614 = vpop.f32.mrb[0].mxu0
    %615 = vdwg.mxu0
    %s616 = scalar_lea.vmem [#allocation2], 128
    %617 = vst [vmem:[%s616] sm:$0xff] %v569
    %618 = vst [vmem:[%s616 + $0x8] sm:$0xff] %v571
    %619 = vst [vmem:[%s616 + $0x10] sm:$0xff] %v610
    %620 = vst [vmem:[%s616 + $0x18] sm:$0xff] %v612
    %s621 = scalar_lea.vmem [#allocation3], 20
    %v622 = vld [vmem:[%s621] sm:$0xf]
    %v624 = vsel %vm163, %v622, 0
    %626 = vmatprep.subr.bf16.mxu0 %v156
    %627 = vmatpush1.bf16.msra.mxu0 %v155
    %628 = vmatprep.subr.bf16.mxu0 0
    %629 = vmatpush1.bf16.msra.mxu0 0
    %630 = vmatprep.subr.bf16.mxu0 0
    %631 = vmatpush1.bf16.msra.mxu0 0
    %632 = vmatprep.subr.bf16.mxu0 0
    %633 = vmatpush1.bf16.msra.mxu0 0
    %634 = vmatprep.subr.bf16.mxu0 0
    %635 = vmatpush1.bf16.msra.mxu0 0
    %636 = vmatprep.subr.bf16.mxu0 0
    %637 = vmatpush1.bf16.msra.mxu0 0
    %638 = vmatprep.subr.bf16.mxu0 0
    %639 = vmatpush1.bf16.msra.mxu0 0
    %640 = vmatprep.subr.bf16.mxu0 0
    %641 = vmatpush1.bf16.msra.mxu0 0
    %642 = vmatprep.subr.bf16.mxu0 0
    %643 = vmatpush1.bf16.msra.mxu0 0
    %644 = vmatprep.subr.bf16.mxu0 0
    %645 = vmatpush1.bf16.msra.mxu0 0
    %646 = vmatprep.subr.bf16.mxu0 0
    %647 = vmatpush1.bf16.msra.mxu0 0
    %648 = vmatprep.subr.bf16.mxu0 0
    %649 = vmatpush1.bf16.msra.mxu0 0
    %650 = vmatprep.subr.bf16.mxu0 0
    %651 = vmatpush1.bf16.msra.mxu0 0
    %652 = vmatprep.subr.bf16.mxu0 0
    %653 = vmatpush1.bf16.msra.mxu0 0
    %654 = vmatprep.subr.bf16.mxu0 0
    %655 = vmatpush1.bf16.msra.mxu0 0
    %656 = vmatprep.subr.bf16.mxu0 0
    %657 = vmatpush1.bf16.msra.mxu0 0
    %658 = vmatprep.mubr.bf16.mxu0 0
    %659 = vmatmul.mubr.bf16.gmra.mrb[0].mxu0 %v624
    %v660 = vpop.f32.mrb[0].mxu0
    %v661 = vadd.f32 %v126, %v660
    %v662 = vpop.f32.mrb[0].mxu0
    %v663 = vadd.f32 %v130, %v662
    %v664 = vpop.f32.mrb[0].mxu0
    %v665 = vpop.f32.mrb[0].mxu0
    %666 = vdwg.mxu0
    %667 = vmatprep.subr.bf16.mxu0 %v158
    %668 = vmatpush1.bf16.msra.mxu0 %v157
    %669 = vmatprep.subr.bf16.mxu0 0
    %670 = vmatpush1.bf16.msra.mxu0 0
    %671 = vmatprep.subr.bf16.mxu0 0
    %672 = vmatpush1.bf16.msra.mxu0 0
    %673 = vmatprep.subr.bf16.mxu0 0
    %674 = vmatpush1.bf16.msra.mxu0 0
    %675 = vmatprep.subr.bf16.mxu0 0
    %676 = vmatpush1.bf16.msra.mxu0 0
    %677 = vmatprep.subr.bf16.mxu0 0
    %678 = vmatpush1.bf16.msra.mxu0 0
    %679 = vmatprep.subr.bf16.mxu0 0
    %680 = vmatpush1.bf16.msra.mxu0 0
    %681 = vmatprep.subr.bf16.mxu0 0
    %682 = vmatpush1.bf16.msra.mxu0 0
    %683 = vmatprep.subr.bf16.mxu0 0
    %684 = vmatpush1.bf16.msra.mxu0 0
    %685 = vmatprep.subr.bf16.mxu0 0
    %686 = vmatpush1.bf16.msra.mxu0 0
    %687 = vmatprep.subr.bf16.mxu0 0
    %688 = vmatpush1.bf16.msra.mxu0 0
    %689 = vmatprep.subr.bf16.mxu0 0
    %690 = vmatpush1.bf16.msra.mxu0 0
    %691 = vmatprep.subr.bf16.mxu0 0
    %692 = vmatpush1.bf16.msra.mxu0 0
    %693 = vmatprep.subr.bf16.mxu0 0
    %694 = vmatpush1.bf16.msra.mxu0 0
    %695 = vmatprep.subr.bf16.mxu0 0
    %696 = vmatpush1.bf16.msra.mxu0 0
    %697 = vmatprep.subr.bf16.mxu0 0
    %698 = vmatpush1.bf16.msra.mxu0 0
    %699 = vmatprep.mubr.bf16.mxu0 0
    %700 = vmatmul.mubr.bf16.gmra.mrb[0].mxu0 %v624
    %v701 = vpop.f32.mrb[0].mxu0
    %v702 = vadd.f32 %v134, %v701
    %v703 = vpop.f32.mrb[0].mxu0
    %v704 = vadd.f32 %v138, %v703
    %v705 = vpop.f32.mrb[0].mxu0
    %v706 = vpop.f32.mrb[0].mxu0
    %707 = vdwg.mxu0
    %s708 = scalar_lea.vmem [#allocation2], 160
    %709 = vst [vmem:[%s708] sm:$0xff] %v661
    %710 = vst [vmem:[%s708 + $0x8] sm:$0xff] %v663
    %711 = vst [vmem:[%s708 + $0x10] sm:$0xff] %v702
    %712 = vst [vmem:[%s708 + $0x18] sm:$0xff] %v704
    %s713 = scalar_lea.vmem [#allocation3], 24
    %v714 = vld [vmem:[%s713] sm:$0xf]
    %v716 = vsel %vm163, %v714, 0
    %718 = vmatprep.subr.bf16.mxu0 %v156
    %719 = vmatpush1.bf16.msra.mxu0 %v155
    %720 = vmatprep.subr.bf16.mxu0 0
    %721 = vmatpush1.bf16.msra.mxu0 0
    %722 = vmatprep.subr.bf16.mxu0 0
    %723 = vmatpush1.bf16.msra.mxu0 0
    %724 = vmatprep.subr.bf16.mxu0 0
    %725 = vmatpush1.bf16.msra.mxu0 0
    %726 = vmatprep.subr.bf16.mxu0 0
    %727 = vmatpush1.bf16.msra.mxu0 0
    %728 = vmatprep.subr.bf16.mxu0 0
    %729 = vmatpush1.bf16.msra.mxu0 0
    %730 = vmatprep.subr.bf16.mxu0 0
    %731 = vmatpush1.bf16.msra.mxu0 0
    %732 = vmatprep.subr.bf16.mxu0 0
    %733 = vmatpush1.bf16.msra.mxu0 0
    %734 = vmatprep.subr.bf16.mxu0 0
    %735 = vmatpush1.bf16.msra.mxu0 0
    %736 = vmatprep.subr.bf16.mxu0 0
    %737 = vmatpush1.bf16.msra.mxu0 0
    %738 = vmatprep.subr.bf16.mxu0 0
    %739 = vmatpush1.bf16.msra.mxu0 0
    %740 = vmatprep.subr.bf16.mxu0 0
    %741 = vmatpush1.bf16.msra.mxu0 0
    %742 = vmatprep.subr.bf16.mxu0 0
    %743 = vmatpush1.bf16.msra.mxu0 0
    %744 = vmatprep.subr.bf16.mxu0 0
    %745 = vmatpush1.bf16.msra.mxu0 0
    %746 = vmatprep.subr.bf16.mxu0 0
    %747 = vmatpush1.bf16.msra.mxu0 0
    %748 = vmatprep.subr.bf16.mxu0 0
    %749 = vmatpush1.bf16.msra.mxu0 0
    %750 = vmatprep.mubr.bf16.mxu0 0
    %751 = vmatmul.mubr.bf16.gmra.mrb[0].mxu0 %v716
    %v752 = vpop.f32.mrb[0].mxu0
    %v753 = vadd.f32 %v126, %v752
    %v754 = vpop.f32.mrb[0].mxu0
    %v755 = vadd.f32 %v130, %v754
    %v756 = vpop.f32.mrb[0].mxu0
    %v757 = vpop.f32.mrb[0].mxu0
    %758 = vdwg.mxu0
    %759 = vmatprep.subr.bf16.mxu0 %v158
    %760 = vmatpush1.bf16.msra.mxu0 %v157
    %761 = vmatprep.subr.bf16.mxu0 0
    %762 = vmatpush1.bf16.msra.mxu0 0
    %763 = vmatprep.subr.bf16.mxu0 0
    %764 = vmatpush1.bf16.msra.mxu0 0
    %765 = vmatprep.subr.bf16.mxu0 0
    %766 = vmatpush1.bf16.msra.mxu0 0
    %767 = vmatprep.subr.bf16.mxu0 0
    %768 = vmatpush1.bf16.msra.mxu0 0
    %769 = vmatprep.subr.bf16.mxu0 0
    %770 = vmatpush1.bf16.msra.mxu0 0
    %771 = vmatprep.subr.bf16.mxu0 0
    %772 = vmatpush1.bf16.msra.mxu0 0
    %773 = vmatprep.subr.bf16.mxu0 0
    %774 = vmatpush1.bf16.msra.mxu0 0
    %775 = vmatprep.subr.bf16.mxu0 0
    %776 = vmatpush1.bf16.msra.mxu0 0
    %777 = vmatprep.subr.bf16.mxu0 0
    %778 = vmatpush1.bf16.msra.mxu0 0
    %779 = vmatprep.subr.bf16.mxu0 0
    %780 = vmatpush1.bf16.msra.mxu0 0
    %781 = vmatprep.subr.bf16.mxu0 0
    %782 = vmatpush1.bf16.msra.mxu0 0
    %783 = vmatprep.subr.bf16.mxu0 0
    %784 = vmatpush1.bf16.msra.mxu0 0
    %785 = vmatprep.subr.bf16.mxu0 0
    %786 = vmatpush1.bf16.msra.mxu0 0
    %787 = vmatprep.subr.bf16.mxu0 0
    %788 = vmatpush1.bf16.msra.mxu0 0
    %789 = vmatprep.subr.bf16.mxu0 0
    %790 = vmatpush1.bf16.msra.mxu0 0
    %791 = vmatprep.mubr.bf16.mxu0 0
    %792 = vmatmul.mubr.bf16.gmra.mrb[0].mxu0 %v716
    %v793 = vpop.f32.mrb[0].mxu0
    %v794 = vadd.f32 %v134, %v793
    %v795 = vpop.f32.mrb[0].mxu0
    %v796 = vadd.f32 %v138, %v795
    %v797 = vpop.f32.mrb[0].mxu0
    %v798 = vpop.f32.mrb[0].mxu0
    %799 = vdwg.mxu0
    %s800 = scalar_lea.vmem [#allocation2], 192
    %801 = vst [vmem:[%s800] sm:$0xff] %v753
    %802 = vst [vmem:[%s800 + $0x8] sm:$0xff] %v755
    %803 = vst [vmem:[%s800 + $0x10] sm:$0xff] %v794
    %804 = vst [vmem:[%s800 + $0x18] sm:$0xff] %v796
    %s805 = scalar_lea.vmem [#allocation3], 28
    %v806 = vld [vmem:[%s805] sm:$0xf]
    %v808 = vsel %vm163, %v806, 0
    %810 = vmatprep.subr.bf16.mxu0 %v156
    %811 = vmatpush1.bf16.msra.mxu0 %v155
    %812 = vmatprep.subr.bf16.mxu0 0
    %813 = vmatpush1.bf16.msra.mxu0 0
    %814 = vmatprep.subr.bf16.mxu0 0
    %815 = vmatpush1.bf16.msra.mxu0 0
    %816 = vmatprep.subr.bf16.mxu0 0
    %817 = vmatpush1.bf16.msra.mxu0 0
    %818 = vmatprep.subr.bf16.mxu0 0
    %819 = vmatpush1.bf16.msra.mxu0 0
    %820 = vmatprep.subr.bf16.mxu0 0
    %821 = vmatpush1.bf16.msra.mxu0 0
    %822 = vmatprep.subr.bf16.mxu0 0
    %823 = vmatpush1.bf16.msra.mxu0 0
    %824 = vmatprep.subr.bf16.mxu0 0
    %825 = vmatpush1.bf16.msra.mxu0 0
    %826 = vmatprep.subr.bf16.mxu0 0
    %827 = vmatpush1.bf16.msra.mxu0 0
    %828 = vmatprep.subr.bf16.mxu0 0
    %829 = vmatpush1.bf16.msra.mxu0 0
    %830 = vmatprep.subr.bf16.mxu0 0
    %831 = vmatpush1.bf16.msra.mxu0 0
    %832 = vmatprep.subr.bf16.mxu0 0
    %833 = vmatpush1.bf16.msra.mxu0 0
    %834 = vmatprep.subr.bf16.mxu0 0
    %835 = vmatpush1.bf16.msra.mxu0 0
    %836 = vmatprep.subr.bf16.mxu0 0
    %837 = vmatpush1.bf16.msra.mxu0 0
    %838 = vmatprep.subr.bf16.mxu0 0
    %839 = vmatpush1.bf16.msra.mxu0 0
    %840 = vmatprep.subr.bf16.mxu0 0
    %841 = vmatpush1.bf16.msra.mxu0 0
    %842 = vmatprep.mubr.bf16.mxu0 0
    %843 = vmatmul.mubr.bf16.gmra.mrb[0].mxu0 %v808
    %v844 = vpop.f32.mrb[0].mxu0
    %v845 = vadd.f32 %v126, %v844
    %v846 = vpop.f32.mrb[0].mxu0
    %v847 = vadd.f32 %v130, %v846
    %v848 = vpop.f32.mrb[0].mxu0
    %v849 = vpop.f32.mrb[0].mxu0
    %850 = vdwg.mxu0
    %851 = vmatprep.subr.bf16.mxu0 %v158
    %852 = vmatpush1.bf16.msra.mxu0 %v157
    %853 = vmatprep.subr.bf16.mxu0 0
    %854 = vmatpush1.bf16.msra.mxu0 0
    %855 = vmatprep.subr.bf16.mxu0 0
    %856 = vmatpush1.bf16.msra.mxu0 0
    %857 = vmatprep.subr.bf16.mxu0 0
    %858 = vmatpush1.bf16.msra.mxu0 0
    %859 = vmatprep.subr.bf16.mxu0 0
    %860 = vmatpush1.bf16.msra.mxu0 0
    %861 = vmatprep.subr.bf16.mxu0 0
    %862 = vmatpush1.bf16.msra.mxu0 0
    %863 = vmatprep.subr.bf16.mxu0 0
    %864 = vmatpush1.bf16.msra.mxu0 0
    %865 = vmatprep.subr.bf16.mxu0 0
    %866 = vmatpush1.bf16.msra.mxu0 0
    %867 = vmatprep.subr.bf16.mxu0 0
    %868 = vmatpush1.bf16.msra.mxu0 0
    %869 = vmatprep.subr.bf16.mxu0 0
    %870 = vmatpush1.bf16.msra.mxu0 0
    %871 = vmatprep.subr.bf16.mxu0 0
    %872 = vmatpush1.bf16.msra.mxu0 0
    %873 = vmatprep.subr.bf16.mxu0 0
    %874 = vmatpush1.bf16.msra.mxu0 0
    %875 = vmatprep.subr.bf16.mxu0 0
    %876 = vmatpush1.bf16.msra.mxu0 0
    %877 = vmatprep.subr.bf16.mxu0 0
    %878 = vmatpush1.bf16.msra.mxu0 0
    %879 = vmatprep.subr.bf16.mxu0 0
    %880 = vmatpush1.bf16.msra.mxu0 0
    %881 = vmatprep.subr.bf16.mxu0 0
    %882 = vmatpush1.bf16.msra.mxu0 0
    %883 = vmatprep.mubr.bf16.mxu0 0
    %884 = vmatmul.mubr.bf16.gmra.mrb[0].mxu0 %v808
    %v885 = vpop.f32.mrb[0].mxu0
    %v886 = vadd.f32 %v134, %v885
    %v887 = vpop.f32.mrb[0].mxu0
    %v888 = vadd.f32 %v138, %v887
    %v889 = vpop.f32.mrb[0].mxu0
    %v890 = vpop.f32.mrb[0].mxu0
    %891 = vdwg.mxu0
    %s892 = scalar_lea.vmem [#allocation2], 224
    %893 = vst [vmem:[%s892] sm:$0xff] %v845
    %894 = vst [vmem:[%s892 + $0x8] sm:$0xff] %v847
    %895 = vst [vmem:[%s892 + $0x10] sm:$0xff] %v886
    %896 = vst [vmem:[%s892 + $0x18] sm:$0xff] %v888
    %v897 = vld [vmem:[#allocation2] sm:$0xff]
    %v898 = vld [vmem:[#allocation2 + $0x8] sm:$0xff]
    %v899 = vld [vmem:[#allocation2 + $0x10] sm:$0xff]
    %v900 = vld [vmem:[#allocation2 + $0x18] sm:$0xff]
    %v933 = vunpack.c.l.b16 %v88
    %v934 = vunpack.c.h.b16 %v88
    %v935 = vunpack.c.l.b16 %v89
    %v936 = vunpack.c.h.b16 %v89
    %v937 = vunpack.c.l.b16 %v90
    %v938 = vunpack.c.h.b16 %v90
    %v939 = vunpack.c.l.b16 %v91
    %v940 = vunpack.c.h.b16 %v91
    %v941 = vunpack.c.l.b16 %v92
    %v942 = vunpack.c.h.b16 %v92
    %v943 = vunpack.c.l.b16 %v93
    %v944 = vunpack.c.h.b16 %v93
    %v945 = vunpack.c.l.b16 %v94
    %v946 = vunpack.c.h.b16 %v94
    %v947 = vunpack.c.l.b16 %v95
    %v948 = vunpack.c.h.b16 %v95
    %v949 = vunpack.c.l.b16 %v96
    %v950 = vunpack.c.h.b16 %v96
    %v951 = vunpack.c.l.b16 %v97
    %v952 = vunpack.c.h.b16 %v97
    %v953 = vunpack.c.l.b16 %v98
    %v954 = vunpack.c.h.b16 %v98
    %v955 = vunpack.c.l.b16 %v99
    %v956 = vunpack.c.h.b16 %v99
    %v957 = vunpack.c.l.b16 %v100
    %v958 = vunpack.c.h.b16 %v100
    %v959 = vunpack.c.l.b16 %v101
    %v960 = vunpack.c.h.b16 %v101
    %v961 = vunpack.c.l.b16 %v102
    %v962 = vunpack.c.h.b16 %v102
    %v963 = vunpack.c.l.b16 %v103
    %v964 = vunpack.c.h.b16 %v103
    %v965 = vunpack.c.l.b16 %v104
    %v966 = vunpack.c.h.b16 %v104
    %v967 = vunpack.c.l.b16 %v105
    %v968 = vunpack.c.h.b16 %v105
    %v969 = vunpack.c.l.b16 %v106
    %v970 = vunpack.c.h.b16 %v106
    %v971 = vunpack.c.l.b16 %v107
    %v972 = vunpack.c.h.b16 %v107
    %v973 = vunpack.c.l.b16 %v108
    %v974 = vunpack.c.h.b16 %v108
    %v975 = vunpack.c.l.b16 %v109
    %v976 = vunpack.c.h.b16 %v109
    %v977 = vunpack.c.l.b16 %v110
    %v978 = vunpack.c.h.b16 %v110
    %v979 = vunpack.c.l.b16 %v111
    %v980 = vunpack.c.h.b16 %v111
    %v981 = vunpack.c.l.b16 %v112
    %v982 = vunpack.c.h.b16 %v112
    %v983 = vunpack.c.l.b16 %v113
    %v984 = vunpack.c.h.b16 %v113
    %v985 = vunpack.c.l.b16 %v114
    %v986 = vunpack.c.h.b16 %v114
    %v987 = vunpack.c.l.b16 %v115
    %v988 = vunpack.c.h.b16 %v115
    %v989 = vunpack.c.l.b16 %v116
    %v990 = vunpack.c.h.b16 %v116
    %v991 = vunpack.c.l.b16 %v117
    %v992 = vunpack.c.h.b16 %v117
    %v993 = vunpack.c.l.b16 %v118
    %v994 = vunpack.c.h.b16 %v118
    %v995 = vunpack.c.l.b16 %v119
    %v996 = vunpack.c.h.b16 %v119
    %v997 = vpack.c.b16 %v937, %v933
    %v998 = vpack.c.b16 %v938, %v934
    %v999 = vpack.c.b16 %v939, %v935
    %v1000 = vpack.c.b16 %v940, %v936
    %v1001 = vpack.c.b16 %v945, %v941
    %v1002 = vpack.c.b16 %v946, %v942
    %v1003 = vpack.c.b16 %v947, %v943
    %v1004 = vpack.c.b16 %v948, %v944
    %v1005 = vpack.c.b16 %v953, %v949
    %v1006 = vpack.c.b16 %v954, %v950
    %v1007 = vpack.c.b16 %v955, %v951
    %v1008 = vpack.c.b16 %v956, %v952
    %v1009 = vpack.c.b16 %v961, %v957
    %v1010 = vpack.c.b16 %v962, %v958
    %v1011 = vpack.c.b16 %v963, %v959
    %v1012 = vpack.c.b16 %v964, %v960
    %v1013 = vpack.c.b16 %v969, %v965
    %v1014 = vpack.c.b16 %v970, %v966
    %v1015 = vpack.c.b16 %v971, %v967
    %v1016 = vpack.c.b16 %v972, %v968
    %v1017 = vpack.c.b16 %v977, %v973
    %v1018 = vpack.c.b16 %v978, %v974
    %v1019 = vpack.c.b16 %v979, %v975
    %v1020 = vpack.c.b16 %v980, %v976
    %v1021 = vpack.c.b16 %v985, %v981
    %v1022 = vpack.c.b16 %v986, %v982
    %v1023 = vpack.c.b16 %v987, %v983
    %v1024 = vpack.c.b16 %v988, %v984
    %v1025 = vpack.c.b16 %v993, %v989
    %v1026 = vpack.c.b16 %v994, %v990
    %v1027 = vpack.c.b16 %v995, %v991
    %v1028 = vpack.c.b16 %v996, %v992
    %1061 = vmatprep.subr.bf16.mxu0 %v998
    %1062 = vmatpush1.bf16.msra.mxu0 %v997
    %1063 = vmatprep.subr.bf16.mxu0 %v1002
    %1064 = vmatpush1.bf16.msra.mxu0 %v1001
    %1065 = vmatprep.subr.bf16.mxu0 %v1006
    %1066 = vmatpush1.bf16.msra.mxu0 %v1005
    %1067 = vmatprep.subr.bf16.mxu0 %v1010
    %1068 = vmatpush1.bf16.msra.mxu0 %v1009
    %1069 = vmatprep.subr.bf16.mxu0 %v1014
    %1070 = vmatpush1.bf16.msra.mxu0 %v1013
    %1071 = vmatprep.subr.bf16.mxu0 %v1018
    %1072 = vmatpush1.bf16.msra.mxu0 %v1017
    %1073 = vmatprep.subr.bf16.mxu0 %v1022
    %1074 = vmatpush1.bf16.msra.mxu0 %v1021
    %1075 = vmatprep.subr.bf16.mxu0 %v1026
    %1076 = vmatpush1.bf16.msra.mxu0 %v1025
    %1077 = vmatprep.subr.bf16.mxu0 0
    %1078 = vmatpush1.bf16.msra.mxu0 0
    %1079 = vmatprep.subr.bf16.mxu0 0
    %1080 = vmatpush1.bf16.msra.mxu0 0
    %1081 = vmatprep.subr.bf16.mxu0 0
    %1082 = vmatpush1.bf16.msra.mxu0 0
    %1083 = vmatprep.subr.bf16.mxu0 0
    %1084 = vmatpush1.bf16.msra.mxu0 0
    %1085 = vmatprep.subr.bf16.mxu0 0
    %1086 = vmatpush1.bf16.msra.mxu0 0
    %1087 = vmatprep.subr.bf16.mxu0 0
    %1088 = vmatpush1.bf16.msra.mxu0 0
    %1089 = vmatprep.subr.bf16.mxu0 0
    %1090 = vmatpush1.bf16.msra.mxu0 0
    %1091 = vmatprep.subr.bf16.mxu0 0
    %1092 = vmatpush1.bf16.msra.mxu0 0
    %1093 = vmatprep.mubr.bf16.mxu0 0
    %1094 = vmatmul.mubr.bf16.gmra.mrb[0].mxu0 0
    %v1095 = vpop.f32.mrb[0].mxu0
    %v1096 = vadd.f32 0.0, %v1095
    %v1097 = vpop.f32.mrb[0].mxu0
    %v1098 = vadd.f32 0.0, %v1097
    %v1099 = vpop.f32.mrb[0].mxu0
    %v1100 = vpop.f32.mrb[0].mxu0
    %1101 = vdwg.mxu0
    %1102 = vmatprep.subr.bf16.mxu0 %v1000
    %1103 = vmatpush1.bf16.msra.mxu0 %v999
    %1104 = vmatprep.subr.bf16.mxu0 %v1004
    %1105 = vmatpush1.bf16.msra.mxu0 %v1003
    %1106 = vmatprep.subr.bf16.mxu0 %v1008
    %1107 = vmatpush1.bf16.msra.mxu0 %v1007
    %1108 = vmatprep.subr.bf16.mxu0 %v1012
    %1109 = vmatpush1.bf16.msra.mxu0 %v1011
    %1110 = vmatprep.subr.bf16.mxu0 %v1016
    %1111 = vmatpush1.bf16.msra.mxu0 %v1015
    %1112 = vmatprep.subr.bf16.mxu0 %v1020
    %1113 = vmatpush1.bf16.msra.mxu0 %v1019
    %1114 = vmatprep.subr.bf16.mxu0 %v1024
    %1115 = vmatpush1.bf16.msra.mxu0 %v1023
    %1116 = vmatprep.subr.bf16.mxu0 %v1028
    %1117 = vmatpush1.bf16.msra.mxu0 %v1027
    %1118 = vmatprep.subr.bf16.mxu0 0
    %1119 = vmatpush1.bf16.msra.mxu0 0
    %1120 = vmatprep.subr.bf16.mxu0 0
    %1121 = vmatpush1.bf16.msra.mxu0 0
    %1122 = vmatprep.subr.bf16.mxu0 0
    %1123 = vmatpush1.bf16.msra.mxu0 0
    %1124 = vmatprep.subr.bf16.mxu0 0
    %1125 = vmatpush1.bf16.msra.mxu0 0
    %1126 = vmatprep.subr.bf16.mxu0 0
    %1127 = vmatpush1.bf16.msra.mxu0 0
    %1128 = vmatprep.subr.bf16.mxu0 0
    %1129 = vmatpush1.bf16.msra.mxu0 0
    %1130 = vmatprep.subr.bf16.mxu0 0
    %1131 = vmatpush1.bf16.msra.mxu0 0
    %1132 = vmatprep.subr.bf16.mxu0 0
    %1133 = vmatpush1.bf16.msra.mxu0 0
    %1134 = vmatprep.mubr.bf16.mxu0 0
    %1135 = vmatmul.mubr.bf16.gmra.mrb[0].mxu0 0
    %v1136 = vpop.f32.mrb[0].mxu0
    %v1137 = vadd.f32 0.0, %v1136
    %v1138 = vpop.f32.mrb[0].mxu0
    %v1139 = vadd.f32 0.0, %v1138
    %v1140 = vpop.f32.mrb[0].mxu0
    %v1141 = vpop.f32.mrb[0].mxu0
    %1142 = vdwg.mxu0
    %v1143 = vadd.f32 %v897, %v1096
    %v1144 = vadd.f32 %v898, %v1098
    %v1145 = vadd.f32 %v899, %v1137
    %v1146 = vadd.f32 %v900, %v1139
    %v1147 = vxor.u32 %v1143, 2147483648
    %v1148 = vxor.u32 %v1144, 2147483648
    %v1149 = vxor.u32 %v1145, 2147483648
    %v1150 = vmul.f32 %v1147, 1.442695
    %v1151 = vpow.pop %v1150
    %v1152 = vmul.f32 %v1148, 1.442695
    %v1153 = vpow.pop %v1152
    %v1154 = vmul.f32 %v1149, 1.442695
    %v1155 = vpow.pop %v1154
    %v1156 = vadd.f32 %v1151, 1.0
    %v1157 = vadd.f32 %v1153, 1.0
    %v1158 = vadd.f32 %v1155, 1.0
    %v1159 = vrcp.pop %v1156
    %v1160 = vmul.f32 1.0, %v1159
    %v1161 = vrcp.pop %v1157
    %v1162 = vmul.f32 1.0, %v1161
    %v1163 = vrcp.pop %v1158
    %v1164 = vmul.f32 1.0, %v1163
    %v1165 = vtanh.pop %v1146
    %v1166 = vmul.f32 %v1162, 0.0
    %v1167 = vmul.f32 %v1160, %v1165
    %v1168 = vadd.f32 %v1166, %v1167
    %v1169 = vtanh.pop %v1168
    %v1170 = vmul.f32 %v1164, %v1169
    %vm1171 = vcmp.eq.s32.totalorder %v120, 0
    %v1172 = vsel %vm1171, 1, 0
    %1173 = vset.pattern.permute.xlu0 0
    %1174 = vperm.xlu0 %1173, %v1172
    %v1175 = vpop.permute.xlu0 %1174
    %vm1176 = vcmp.eq.s32.totalorder %v1175, 1
    %v1177 = vsel %vm1176, %v1170, 0.0
    %v1178 = vld [vmem:[%s340] sm:$0xff]
    %v1179 = vld [vmem:[%s340 + $0x8] sm:$0xff]
    %v1180 = vld [vmem:[%s340 + $0x10] sm:$0xff]
    %v1181 = vld [vmem:[%s340 + $0x18] sm:$0xff]
    %v1182 = vpack.c.bf16 %v1170, %v1170
    %1183 = vmatprep.subr.bf16.mxu0 %v998
    %1184 = vmatpush1.bf16.msra.mxu0 %v997
    %1185 = vmatprep.subr.bf16.mxu0 %v1002
    %1186 = vmatpush1.bf16.msra.mxu0 %v1001
    %1187 = vmatprep.subr.bf16.mxu0 %v1006
    %1188 = vmatpush1.bf16.msra.mxu0 %v1005
    %1189 = vmatprep.subr.bf16.mxu0 %v1010
    %1190 = vmatpush1.bf16.msra.mxu0 %v1009
    %1191 = vmatprep.subr.bf16.mxu0 %v1014
    %1192 = vmatpush1.bf16.msra.mxu0 %v1013
    %1193 = vmatprep.subr.bf16.mxu0 %v1018
    %1194 = vmatpush1.bf16.msra.mxu0 %v1017
    %1195 = vmatprep.subr.bf16.mxu0 %v1022
    %1196 = vmatpush1.bf16.msra.mxu0 %v1021
    %1197 = vmatprep.subr.bf16.mxu0 %v1026
    %1198 = vmatpush1.bf16.msra.mxu0 %v1025
    %1199 = vmatprep.subr.bf16.mxu0 0
    %1200 = vmatpush1.bf16.msra.mxu0 0
    %1201 = vmatprep.subr.bf16.mxu0 0
    %1202 = vmatpush1.bf16.msra.mxu0 0
    %1203 = vmatprep.subr.bf16.mxu0 0
    %1204 = vmatpush1.bf16.msra.mxu0 0
    %1205 = vmatprep.subr.bf16.mxu0 0
    %1206 = vmatpush1.bf16.msra.mxu0 0
    %1207 = vmatprep.subr.bf16.mxu0 0
    %1208 = vmatpush1.bf16.msra.mxu0 0
    %1209 = vmatprep.subr.bf16.mxu0 0
    %1210 = vmatpush1.bf16.msra.mxu0 0
    %1211 = vmatprep.subr.bf16.mxu0 0
    %1212 = vmatpush1.bf16.msra.mxu0 0
    %1213 = vmatprep.subr.bf16.mxu0 0
    %1214 = vmatpush1.bf16.msra.mxu0 0
    %1215 = vmatprep.mubr.bf16.mxu0 0
    %1216 = vmatmul.mubr.bf16.gmra.mrb[0].mxu0 %v1182
    %v1217 = vpop.f32.mrb[0].mxu0
    %v1218 = vadd.f32 0.0, %v1217
    %v1219 = vpop.f32.mrb[0].mxu0
    %v1220 = vadd.f32 0.0, %v1219
    %v1221 = vpop.f32.mrb[0].mxu0
    %v1222 = vpop.f32.mrb[0].mxu0
    %1223 = vdwg.mxu0
    %1224 = vmatprep.subr.bf16.mxu0 %v1000
    %1225 = vmatpush1.bf16.msra.mxu0 %v999
    %1226 = vmatprep.subr.bf16.mxu0 %v1004
    %1227 = vmatpush1.bf16.msra.mxu0 %v1003
    %1228 = vmatprep.subr.bf16.mxu0 %v1008
    %1229 = vmatpush1.bf16.msra.mxu0 %v1007
    %1230 = vmatprep.subr.bf16.mxu0 %v1012
    %1231 = vmatpush1.bf16.msra.mxu0 %v1011
    %1232 = vmatprep.subr.bf16.mxu0 %v1016
    %1233 = vmatpush1.bf16.msra.mxu0 %v1015
    %1234 = vmatprep.subr.bf16.mxu0 %v1020
    %1235 = vmatpush1.bf16.msra.mxu0 %v1019
    %1236 = vmatprep.subr.bf16.mxu0 %v1024
    %1237 = vmatpush1.bf16.msra.mxu0 %v1023
    %1238 = vmatprep.subr.bf16.mxu0 %v1028
    %1239 = vmatpush1.bf16.msra.mxu0 %v1027
    %1240 = vmatprep.subr.bf16.mxu0 0
    %1241 = vmatpush1.bf16.msra.mxu0 0
    %1242 = vmatprep.subr.bf16.mxu0 0
    %1243 = vmatpush1.bf16.msra.mxu0 0
    %1244 = vmatprep.subr.bf16.mxu0 0
    %1245 = vmatpush1.bf16.msra.mxu0 0
    %1246 = vmatprep.subr.bf16.mxu0 0
    %1247 = vmatpush1.bf16.msra.mxu0 0
    %1248 = vmatprep.subr.bf16.mxu0 0
    %1249 = vmatpush1.bf16.msra.mxu0 0
    %1250 = vmatprep.subr.bf16.mxu0 0
    %1251 = vmatpush1.bf16.msra.mxu0 0
    %1252 = vmatprep.subr.bf16.mxu0 0
    %1253 = vmatpush1.bf16.msra.mxu0 0
    %1254 = vmatprep.subr.bf16.mxu0 0
    %1255 = vmatpush1.bf16.msra.mxu0 0
    %1256 = vmatprep.mubr.bf16.mxu0 0
    %1257 = vmatmul.mubr.bf16.gmra.mrb[0].mxu0 %v1182
    %v1258 = vpop.f32.mrb[0].mxu0
    %v1259 = vadd.f32 0.0, %v1258
    %v1260 = vpop.f32.mrb[0].mxu0
    %v1261 = vadd.f32 0.0, %v1260
    %v1262 = vpop.f32.mrb[0].mxu0
    %v1263 = vpop.f32.mrb[0].mxu0
    %1264 = vdwg.mxu0
    %v1265 = vadd.f32 %v1178, %v1218
    %v1266 = vadd.f32 %v1179, %v1220
    %v1267 = vadd.f32 %v1180, %v1259
    %v1268 = vadd.f32 %v1181, %v1261
    %v1269 = vxor.u32 %v1265, 2147483648
    %v1270 = vxor.u32 %v1266, 2147483648
    %v1271 = vxor.u32 %v1267, 2147483648
    %v1272 = vmul.f32 %v1269, 1.442695
    %v1273 = vpow.pop %v1272
    %v1274 = vmul.f32 %v1270, 1.442695
    %v1275 = vpow.pop %v1274
    %v1276 = vmul.f32 %v1271, 1.442695
    %v1277 = vpow.pop %v1276
    %v1278 = vadd.f32 %v1273, 1.0
    %v1279 = vadd.f32 %v1275, 1.0
    %v1280 = vadd.f32 %v1277, 1.0
    %v1281 = vrcp.pop %v1278
    %v1282 = vmul.f32 1.0, %v1281
    %v1283 = vrcp.pop %v1279
    %v1284 = vmul.f32 1.0, %v1283
    %v1285 = vrcp.pop %v1280
    %v1286 = vmul.f32 1.0, %v1285
    %v1287 = vtanh.pop %v1268
    %v1288 = vmul.f32 %v1284, %v1168
    %v1289 = vmul.f32 %v1282, %v1287
    %v1290 = vadd.f32 %v1288, %v1289
    %v1291 = vtanh.pop %v1290
    %v1292 = vmul.f32 %v1286, %v1291
    %vm1293 = vcmp.eq.s32.totalorder %v120, 1
    %v1294 = vsel %vm1293, 1, 0
    %1295 = vset.pattern.permute.xlu0 0
    %1296 = vperm.xlu0 %1295, %v1294
    %v1297 = vpop.permute.xlu0 %1296
    %vm1298 = vcmp.eq.s32.totalorder %v1297, 1
    %v1299 = vsel %vm1298, %v1292, %v1177
    %v1300 = vld [vmem:[%s432] sm:$0xff]
    %v1301 = vld [vmem:[%s432 + $0x8] sm:$0xff]
    %v1302 = vld [vmem:[%s432 + $0x10] sm:$0xff]
    %v1303 = vld [vmem:[%s432 + $0x18] sm:$0xff]
    %v1304 = vpack.c.bf16 %v1292, %v1292
    %1305 = vmatprep.subr.bf16.mxu0 %v998
    %1306 = vmatpush1.bf16.msra.mxu0 %v997
    %1307 = vmatprep.subr.bf16.mxu0 %v1002
    %1308 = vmatpush1.bf16.msra.mxu0 %v1001
    %1309 = vmatprep.subr.bf16.mxu0 %v1006
    %1310 = vmatpush1.bf16.msra.mxu0 %v1005
    %1311 = vmatprep.subr.bf16.mxu0 %v1010
    %1312 = vmatpush1.bf16.msra.mxu0 %v1009
    %1313 = vmatprep.subr.bf16.mxu0 %v1014
    %1314 = vmatpush1.bf16.msra.mxu0 %v1013
    %1315 = vmatprep.subr.bf16.mxu0 %v1018
    %1316 = vmatpush1.bf16.msra.mxu0 %v1017
    %1317 = vmatprep.subr.bf16.mxu0 %v1022
    %1318 = vmatpush1.bf16.msra.mxu0 %v1021
    %1319 = vmatprep.subr.bf16.mxu0 %v1026
    %1320 = vmatpush1.bf16.msra.mxu0 %v1025
    %1321 = vmatprep.subr.bf16.mxu0 0
    %1322 = vmatpush1.bf16.msra.mxu0 0
    %1323 = vmatprep.subr.bf16.mxu0 0
    %1324 = vmatpush1.bf16.msra.mxu0 0
    %1325 = vmatprep.subr.bf16.mxu0 0
    %1326 = vmatpush1.bf16.msra.mxu0 0
    %1327 = vmatprep.subr.bf16.mxu0 0
    %1328 = vmatpush1.bf16.msra.mxu0 0
    %1329 = vmatprep.subr.bf16.mxu0 0
    %1330 = vmatpush1.bf16.msra.mxu0 0
    %1331 = vmatprep.subr.bf16.mxu0 0
    %1332 = vmatpush1.bf16.msra.mxu0 0
    %1333 = vmatprep.subr.bf16.mxu0 0
    %1334 = vmatpush1.bf16.msra.mxu0 0
    %1335 = vmatprep.subr.bf16.mxu0 0
    %1336 = vmatpush1.bf16.msra.mxu0 0
    %1337 = vmatprep.mubr.bf16.mxu0 0
    %1338 = vmatmul.mubr.bf16.gmra.mrb[0].mxu0 %v1304
    %v1339 = vpop.f32.mrb[0].mxu0
    %v1340 = vadd.f32 0.0, %v1339
    %v1341 = vpop.f32.mrb[0].mxu0
    %v1342 = vadd.f32 0.0, %v1341
    %v1343 = vpop.f32.mrb[0].mxu0
    %v1344 = vpop.f32.mrb[0].mxu0
    %1345 = vdwg.mxu0
    %1346 = vmatprep.subr.bf16.mxu0 %v1000
    %1347 = vmatpush1.bf16.msra.mxu0 %v999
    %1348 = vmatprep.subr.bf16.mxu0 %v1004
    %1349 = vmatpush1.bf16.msra.mxu0 %v1003
    %1350 = vmatprep.subr.bf16.mxu0 %v1008
    %1351 = vmatpush1.bf16.msra.mxu0 %v1007
    %1352 = vmatprep.subr.bf16.mxu0 %v1012
    %1353 = vmatpush1.bf16.msra.mxu0 %v1011
    %1354 = vmatprep.subr.bf16.mxu0 %v1016
    %1355 = vmatpush1.bf16.msra.mxu0 %v1015
    %1356 = vmatprep.subr.bf16.mxu0 %v1020
    %1357 = vmatpush1.bf16.msra.mxu0 %v1019
    %1358 = vmatprep.subr.bf16.mxu0 %v1024
    %1359 = vmatpush1.bf16.msra.mxu0 %v1023
    %1360 = vmatprep.subr.bf16.mxu0 %v1028
    %1361 = vmatpush1.bf16.msra.mxu0 %v1027
    %1362 = vmatprep.subr.bf16.mxu0 0
    %1363 = vmatpush1.bf16.msra.mxu0 0
    %1364 = vmatprep.subr.bf16.mxu0 0
    %1365 = vmatpush1.bf16.msra.mxu0 0
    %1366 = vmatprep.subr.bf16.mxu0 0
    %1367 = vmatpush1.bf16.msra.mxu0 0
    %1368 = vmatprep.subr.bf16.mxu0 0
    %1369 = vmatpush1.bf16.msra.mxu0 0
    %1370 = vmatprep.subr.bf16.mxu0 0
    %1371 = vmatpush1.bf16.msra.mxu0 0
    %1372 = vmatprep.subr.bf16.mxu0 0
    %1373 = vmatpush1.bf16.msra.mxu0 0
    %1374 = vmatprep.subr.bf16.mxu0 0
    %1375 = vmatpush1.bf16.msra.mxu0 0
    %1376 = vmatprep.subr.bf16.mxu0 0
    %1377 = vmatpush1.bf16.msra.mxu0 0
    %1378 = vmatprep.mubr.bf16.mxu0 0
    %1379 = vmatmul.mubr.bf16.gmra.mrb[0].mxu0 %v1304
    %v1380 = vpop.f32.mrb[0].mxu0
    %v1381 = vadd.f32 0.0, %v1380
    %v1382 = vpop.f32.mrb[0].mxu0
    %v1383 = vadd.f32 0.0, %v1382
    %v1384 = vpop.f32.mrb[0].mxu0
    %v1385 = vpop.f32.mrb[0].mxu0
    %1386 = vdwg.mxu0
    %v1387 = vadd.f32 %v1300, %v1340
    %v1388 = vadd.f32 %v1301, %v1342
    %v1389 = vadd.f32 %v1302, %v1381
    %v1390 = vadd.f32 %v1303, %v1383
    %v1391 = vxor.u32 %v1387, 2147483648
    %v1392 = vxor.u32 %v1388, 2147483648
    %v1393 = vxor.u32 %v1389, 2147483648
    %v1394 = vmul.f32 %v1391, 1.442695
    %v1395 = vpow.pop %v1394
    %v1396 = vmul.f32 %v1392, 1.442695
    %v1397 = vpow.pop %v1396
    %v1398 = vmul.f32 %v1393, 1.442695
    %v1399 = vpow.pop %v1398
    %v1400 = vadd.f32 %v1395, 1.0
    %v1401 = vadd.f32 %v1397, 1.0
    %v1402 = vadd.f32 %v1399, 1.0
    %v1403 = vrcp.pop %v1400
    %v1404 = vmul.f32 1.0, %v1403
    %v1405 = vrcp.pop %v1401
    %v1406 = vmul.f32 1.0, %v1405
    %v1407 = vrcp.pop %v1402
    %v1408 = vmul.f32 1.0, %v1407
    %v1409 = vtanh.pop %v1390
    %v1410 = vmul.f32 %v1406, %v1290
    %v1411 = vmul.f32 %v1404, %v1409
    %v1412 = vadd.f32 %v1410, %v1411
    %v1413 = vtanh.pop %v1412
    %v1414 = vmul.f32 %v1408, %v1413
    %vm1415 = vcmp.eq.s32.totalorder %v120, 2
    %v1416 = vsel %vm1415, 1, 0
    %1417 = vset.pattern.permute.xlu0 0
    %1418 = vperm.xlu0 %1417, %v1416
    %v1419 = vpop.permute.xlu0 %1418
    %vm1420 = vcmp.eq.s32.totalorder %v1419, 1
    %v1421 = vsel %vm1420, %v1414, %v1299
    %v1422 = vld [vmem:[%s524] sm:$0xff]
    %v1423 = vld [vmem:[%s524 + $0x8] sm:$0xff]
    %v1424 = vld [vmem:[%s524 + $0x10] sm:$0xff]
    %v1425 = vld [vmem:[%s524 + $0x18] sm:$0xff]
    %v1426 = vpack.c.bf16 %v1414, %v1414
    %1427 = vmatprep.subr.bf16.mxu0 %v998
    %1428 = vmatpush1.bf16.msra.mxu0 %v997
    %1429 = vmatprep.subr.bf16.mxu0 %v1002
    %1430 = vmatpush1.bf16.msra.mxu0 %v1001
    %1431 = vmatprep.subr.bf16.mxu0 %v1006
    %1432 = vmatpush1.bf16.msra.mxu0 %v1005
    %1433 = vmatprep.subr.bf16.mxu0 %v1010
    %1434 = vmatpush1.bf16.msra.mxu0 %v1009
    %1435 = vmatprep.subr.bf16.mxu0 %v1014
    %1436 = vmatpush1.bf16.msra.mxu0 %v1013
    %1437 = vmatprep.subr.bf16.mxu0 %v1018
    %1438 = vmatpush1.bf16.msra.mxu0 %v1017
    %1439 = vmatprep.subr.bf16.mxu0 %v1022
    %1440 = vmatpush1.bf16.msra.mxu0 %v1021
    %1441 = vmatprep.subr.bf16.mxu0 %v1026
    %1442 = vmatpush1.bf16.msra.mxu0 %v1025
    %1443 = vmatprep.subr.bf16.mxu0 0
    %1444 = vmatpush1.bf16.msra.mxu0 0
    %1445 = vmatprep.subr.bf16.mxu0 0
    %1446 = vmatpush1.bf16.msra.mxu0 0
    %1447 = vmatprep.subr.bf16.mxu0 0
    %1448 = vmatpush1.bf16.msra.mxu0 0
    %1449 = vmatprep.subr.bf16.mxu0 0
    %1450 = vmatpush1.bf16.msra.mxu0 0
    %1451 = vmatprep.subr.bf16.mxu0 0
    %1452 = vmatpush1.bf16.msra.mxu0 0
    %1453 = vmatprep.subr.bf16.mxu0 0
    %1454 = vmatpush1.bf16.msra.mxu0 0
    %1455 = vmatprep.subr.bf16.mxu0 0
    %1456 = vmatpush1.bf16.msra.mxu0 0
    %1457 = vmatprep.subr.bf16.mxu0 0
    %1458 = vmatpush1.bf16.msra.mxu0 0
    %1459 = vmatprep.mubr.bf16.mxu0 0
    %1460 = vmatmul.mubr.bf16.gmra.mrb[0].mxu0 %v1426
    %v1461 = vpop.f32.mrb[0].mxu0
    %v1462 = vadd.f32 0.0, %v1461
    %v1463 = vpop.f32.mrb[0].mxu0
    %v1464 = vadd.f32 0.0, %v1463
    %v1465 = vpop.f32.mrb[0].mxu0
    %v1466 = vpop.f32.mrb[0].mxu0
    %1467 = vdwg.mxu0
    %1468 = vmatprep.subr.bf16.mxu0 %v1000
    %1469 = vmatpush1.bf16.msra.mxu0 %v999
    %1470 = vmatprep.subr.bf16.mxu0 %v1004
    %1471 = vmatpush1.bf16.msra.mxu0 %v1003
    %1472 = vmatprep.subr.bf16.mxu0 %v1008
    %1473 = vmatpush1.bf16.msra.mxu0 %v1007
    %1474 = vmatprep.subr.bf16.mxu0 %v1012
    %1475 = vmatpush1.bf16.msra.mxu0 %v1011
    %1476 = vmatprep.subr.bf16.mxu0 %v1016
    %1477 = vmatpush1.bf16.msra.mxu0 %v1015
    %1478 = vmatprep.subr.bf16.mxu0 %v1020
    %1479 = vmatpush1.bf16.msra.mxu0 %v1019
    %1480 = vmatprep.subr.bf16.mxu0 %v1024
    %1481 = vmatpush1.bf16.msra.mxu0 %v1023
    %1482 = vmatprep.subr.bf16.mxu0 %v1028
    %1483 = vmatpush1.bf16.msra.mxu0 %v1027
    %1484 = vmatprep.subr.bf16.mxu0 0
    %1485 = vmatpush1.bf16.msra.mxu0 0
    %1486 = vmatprep.subr.bf16.mxu0 0
    %1487 = vmatpush1.bf16.msra.mxu0 0
    %1488 = vmatprep.subr.bf16.mxu0 0
    %1489 = vmatpush1.bf16.msra.mxu0 0
    %1490 = vmatprep.subr.bf16.mxu0 0
    %1491 = vmatpush1.bf16.msra.mxu0 0
    %1492 = vmatprep.subr.bf16.mxu0 0
    %1493 = vmatpush1.bf16.msra.mxu0 0
    %1494 = vmatprep.subr.bf16.mxu0 0
    %1495 = vmatpush1.bf16.msra.mxu0 0
    %1496 = vmatprep.subr.bf16.mxu0 0
    %1497 = vmatpush1.bf16.msra.mxu0 0
    %1498 = vmatprep.subr.bf16.mxu0 0
    %1499 = vmatpush1.bf16.msra.mxu0 0
    %1500 = vmatprep.mubr.bf16.mxu0 0
    %1501 = vmatmul.mubr.bf16.gmra.mrb[0].mxu0 %v1426
    %v1502 = vpop.f32.mrb[0].mxu0
    %v1503 = vadd.f32 0.0, %v1502
    %v1504 = vpop.f32.mrb[0].mxu0
    %v1505 = vadd.f32 0.0, %v1504
    %v1506 = vpop.f32.mrb[0].mxu0
    %v1507 = vpop.f32.mrb[0].mxu0
    %1508 = vdwg.mxu0
    %v1509 = vadd.f32 %v1422, %v1462
    %v1510 = vadd.f32 %v1423, %v1464
    %v1511 = vadd.f32 %v1424, %v1503
    %v1512 = vadd.f32 %v1425, %v1505
    %v1513 = vxor.u32 %v1509, 2147483648
    %v1514 = vxor.u32 %v1510, 2147483648
    %v1515 = vxor.u32 %v1511, 2147483648
    %v1516 = vmul.f32 %v1513, 1.442695
    %v1517 = vpow.pop %v1516
    %v1518 = vmul.f32 %v1514, 1.442695
    %v1519 = vpow.pop %v1518
    %v1520 = vmul.f32 %v1515, 1.442695
    %v1521 = vpow.pop %v1520
    %v1522 = vadd.f32 %v1517, 1.0
    %v1523 = vadd.f32 %v1519, 1.0
    %v1524 = vadd.f32 %v1521, 1.0
    %v1525 = vrcp.pop %v1522
    %v1526 = vmul.f32 1.0, %v1525
    %v1527 = vrcp.pop %v1523
    %v1528 = vmul.f32 1.0, %v1527
    %v1529 = vrcp.pop %v1524
    %v1530 = vmul.f32 1.0, %v1529
    %v1531 = vtanh.pop %v1512
    %v1532 = vmul.f32 %v1528, %v1412
    %v1533 = vmul.f32 %v1526, %v1531
    %v1534 = vadd.f32 %v1532, %v1533
    %v1535 = vtanh.pop %v1534
    %v1536 = vmul.f32 %v1530, %v1535
    %vm1537 = vcmp.eq.s32.totalorder %v120, 3
    %v1538 = vsel %vm1537, 1, 0
    %1539 = vset.pattern.permute.xlu0 0
    %1540 = vperm.xlu0 %1539, %v1538
    %v1541 = vpop.permute.xlu0 %1540
    %vm1542 = vcmp.eq.s32.totalorder %v1541, 1
    %v1543 = vsel %vm1542, %v1536, %v1421
    %v1544 = vld [vmem:[%s616] sm:$0xff]
    %v1545 = vld [vmem:[%s616 + $0x8] sm:$0xff]
    %v1546 = vld [vmem:[%s616 + $0x10] sm:$0xff]
    %v1547 = vld [vmem:[%s616 + $0x18] sm:$0xff]
    %v1548 = vpack.c.bf16 %v1536, %v1536
    %1549 = vmatprep.subr.bf16.mxu0 %v998
    %1550 = vmatpush1.bf16.msra.mxu0 %v997
    %1551 = vmatprep.subr.bf16.mxu0 %v1002
    %1552 = vmatpush1.bf16.msra.mxu0 %v1001
    %1553 = vmatprep.subr.bf16.mxu0 %v1006
    %1554 = vmatpush1.bf16.msra.mxu0 %v1005
    %1555 = vmatprep.subr.bf16.mxu0 %v1010
    %1556 = vmatpush1.bf16.msra.mxu0 %v1009
    %1557 = vmatprep.subr.bf16.mxu0 %v1014
    %1558 = vmatpush1.bf16.msra.mxu0 %v1013
    %1559 = vmatprep.subr.bf16.mxu0 %v1018
    %1560 = vmatpush1.bf16.msra.mxu0 %v1017
    %1561 = vmatprep.subr.bf16.mxu0 %v1022
    %1562 = vmatpush1.bf16.msra.mxu0 %v1021
    %1563 = vmatprep.subr.bf16.mxu0 %v1026
    %1564 = vmatpush1.bf16.msra.mxu0 %v1025
    %1565 = vmatprep.subr.bf16.mxu0 0
    %1566 = vmatpush1.bf16.msra.mxu0 0
    %1567 = vmatprep.subr.bf16.mxu0 0
    %1568 = vmatpush1.bf16.msra.mxu0 0
    %1569 = vmatprep.subr.bf16.mxu0 0
    %1570 = vmatpush1.bf16.msra.mxu0 0
    %1571 = vmatprep.subr.bf16.mxu0 0
    %1572 = vmatpush1.bf16.msra.mxu0 0
    %1573 = vmatprep.subr.bf16.mxu0 0
    %1574 = vmatpush1.bf16.msra.mxu0 0
    %1575 = vmatprep.subr.bf16.mxu0 0
    %1576 = vmatpush1.bf16.msra.mxu0 0
    %1577 = vmatprep.subr.bf16.mxu0 0
    %1578 = vmatpush1.bf16.msra.mxu0 0
    %1579 = vmatprep.subr.bf16.mxu0 0
    %1580 = vmatpush1.bf16.msra.mxu0 0
    %1581 = vmatprep.mubr.bf16.mxu0 0
    %1582 = vmatmul.mubr.bf16.gmra.mrb[0].mxu0 %v1548
    %v1583 = vpop.f32.mrb[0].mxu0
    %v1584 = vadd.f32 0.0, %v1583
    %v1585 = vpop.f32.mrb[0].mxu0
    %v1586 = vadd.f32 0.0, %v1585
    %v1587 = vpop.f32.mrb[0].mxu0
    %v1588 = vpop.f32.mrb[0].mxu0
    %1589 = vdwg.mxu0
    %1590 = vmatprep.subr.bf16.mxu0 %v1000
    %1591 = vmatpush1.bf16.msra.mxu0 %v999
    %1592 = vmatprep.subr.bf16.mxu0 %v1004
    %1593 = vmatpush1.bf16.msra.mxu0 %v1003
    %1594 = vmatprep.subr.bf16.mxu0 %v1008
    %1595 = vmatpush1.bf16.msra.mxu0 %v1007
    %1596 = vmatprep.subr.bf16.mxu0 %v1012
    %1597 = vmatpush1.bf16.msra.mxu0 %v1011
    %1598 = vmatprep.subr.bf16.mxu0 %v1016
    %1599 = vmatpush1.bf16.msra.mxu0 %v1015
    %1600 = vmatprep.subr.bf16.mxu0 %v1020
    %1601 = vmatpush1.bf16.msra.mxu0 %v1019
    %1602 = vmatprep.subr.bf16.mxu0 %v1024
    %1603 = vmatpush1.bf16.msra.mxu0 %v1023
    %1604 = vmatprep.subr.bf16.mxu0 %v1028
    %1605 = vmatpush1.bf16.msra.mxu0 %v1027
    %1606 = vmatprep.subr.bf16.mxu0 0
    %1607 = vmatpush1.bf16.msra.mxu0 0
    %1608 = vmatprep.subr.bf16.mxu0 0
    %1609 = vmatpush1.bf16.msra.mxu0 0
    %1610 = vmatprep.subr.bf16.mxu0 0
    %1611 = vmatpush1.bf16.msra.mxu0 0
    %1612 = vmatprep.subr.bf16.mxu0 0
    %1613 = vmatpush1.bf16.msra.mxu0 0
    %1614 = vmatprep.subr.bf16.mxu0 0
    %1615 = vmatpush1.bf16.msra.mxu0 0
    %1616 = vmatprep.subr.bf16.mxu0 0
    %1617 = vmatpush1.bf16.msra.mxu0 0
    %1618 = vmatprep.subr.bf16.mxu0 0
    %1619 = vmatpush1.bf16.msra.mxu0 0
    %1620 = vmatprep.subr.bf16.mxu0 0
    %1621 = vmatpush1.bf16.msra.mxu0 0
    %1622 = vmatprep.mubr.bf16.mxu0 0
    %1623 = vmatmul.mubr.bf16.gmra.mrb[0].mxu0 %v1548
    %v1624 = vpop.f32.mrb[0].mxu0
    %v1625 = vadd.f32 0.0, %v1624
    %v1626 = vpop.f32.mrb[0].mxu0
    %v1627 = vadd.f32 0.0, %v1626
    %v1628 = vpop.f32.mrb[0].mxu0
    %v1629 = vpop.f32.mrb[0].mxu0
    %1630 = vdwg.mxu0
    %v1631 = vadd.f32 %v1544, %v1584
    %v1632 = vadd.f32 %v1545, %v1586
    %v1633 = vadd.f32 %v1546, %v1625
    %v1634 = vadd.f32 %v1547, %v1627
    %v1635 = vxor.u32 %v1631, 2147483648
    %v1636 = vxor.u32 %v1632, 2147483648
    %v1637 = vxor.u32 %v1633, 2147483648
    %v1638 = vmul.f32 %v1635, 1.442695
    %v1639 = vpow.pop %v1638
    %v1640 = vmul.f32 %v1636, 1.442695
    %v1641 = vpow.pop %v1640
    %v1642 = vmul.f32 %v1637, 1.442695
    %v1643 = vpow.pop %v1642
    %v1644 = vadd.f32 %v1639, 1.0
    %v1645 = vadd.f32 %v1641, 1.0
    %v1646 = vadd.f32 %v1643, 1.0
    %v1647 = vrcp.pop %v1644
    %v1648 = vmul.f32 1.0, %v1647
    %v1649 = vrcp.pop %v1645
    %v1650 = vmul.f32 1.0, %v1649
    %v1651 = vrcp.pop %v1646
    %v1652 = vmul.f32 1.0, %v1651
    %v1653 = vtanh.pop %v1634
    %v1654 = vmul.f32 %v1650, %v1534
    %v1655 = vmul.f32 %v1648, %v1653
    %v1656 = vadd.f32 %v1654, %v1655
    %v1657 = vtanh.pop %v1656
    %v1658 = vmul.f32 %v1652, %v1657
    %vm1659 = vcmp.eq.s32.totalorder %v120, 4
    %v1660 = vsel %vm1659, 1, 0
    %1661 = vset.pattern.permute.xlu0 0
    %1662 = vperm.xlu0 %1661, %v1660
    %v1663 = vpop.permute.xlu0 %1662
    %vm1664 = vcmp.eq.s32.totalorder %v1663, 1
    %v1665 = vsel %vm1664, %v1658, %v1543
    %v1666 = vld [vmem:[%s708] sm:$0xff]
    %v1667 = vld [vmem:[%s708 + $0x8] sm:$0xff]
    %v1668 = vld [vmem:[%s708 + $0x10] sm:$0xff]
    %v1669 = vld [vmem:[%s708 + $0x18] sm:$0xff]
    %v1670 = vpack.c.bf16 %v1658, %v1658
    %1671 = vmatprep.subr.bf16.mxu0 %v998
    %1672 = vmatpush1.bf16.msra.mxu0 %v997
    %1673 = vmatprep.subr.bf16.mxu0 %v1002
    %1674 = vmatpush1.bf16.msra.mxu0 %v1001
    %1675 = vmatprep.subr.bf16.mxu0 %v1006
    %1676 = vmatpush1.bf16.msra.mxu0 %v1005
    %1677 = vmatprep.subr.bf16.mxu0 %v1010
    %1678 = vmatpush1.bf16.msra.mxu0 %v1009
    %1679 = vmatprep.subr.bf16.mxu0 %v1014
    %1680 = vmatpush1.bf16.msra.mxu0 %v1013
    %1681 = vmatprep.subr.bf16.mxu0 %v1018
    %1682 = vmatpush1.bf16.msra.mxu0 %v1017
    %1683 = vmatprep.subr.bf16.mxu0 %v1022
    %1684 = vmatpush1.bf16.msra.mxu0 %v1021
    %1685 = vmatprep.subr.bf16.mxu0 %v1026
    %1686 = vmatpush1.bf16.msra.mxu0 %v1025
    %1687 = vmatprep.subr.bf16.mxu0 0
    %1688 = vmatpush1.bf16.msra.mxu0 0
    %1689 = vmatprep.subr.bf16.mxu0 0
    %1690 = vmatpush1.bf16.msra.mxu0 0
    %1691 = vmatprep.subr.bf16.mxu0 0
    %1692 = vmatpush1.bf16.msra.mxu0 0
    %1693 = vmatprep.subr.bf16.mxu0 0
    %1694 = vmatpush1.bf16.msra.mxu0 0
    %1695 = vmatprep.subr.bf16.mxu0 0
    %1696 = vmatpush1.bf16.msra.mxu0 0
    %1697 = vmatprep.subr.bf16.mxu0 0
    %1698 = vmatpush1.bf16.msra.mxu0 0
    %1699 = vmatprep.subr.bf16.mxu0 0
    %1700 = vmatpush1.bf16.msra.mxu0 0
    %1701 = vmatprep.subr.bf16.mxu0 0
    %1702 = vmatpush1.bf16.msra.mxu0 0
    %1703 = vmatprep.mubr.bf16.mxu0 0
    %1704 = vmatmul.mubr.bf16.gmra.mrb[0].mxu0 %v1670
    %v1705 = vpop.f32.mrb[0].mxu0
    %v1706 = vadd.f32 0.0, %v1705
    %v1707 = vpop.f32.mrb[0].mxu0
    %v1708 = vadd.f32 0.0, %v1707
    %v1709 = vpop.f32.mrb[0].mxu0
    %v1710 = vpop.f32.mrb[0].mxu0
    %1711 = vdwg.mxu0
    %1712 = vmatprep.subr.bf16.mxu0 %v1000
    %1713 = vmatpush1.bf16.msra.mxu0 %v999
    %1714 = vmatprep.subr.bf16.mxu0 %v1004
    %1715 = vmatpush1.bf16.msra.mxu0 %v1003
    %1716 = vmatprep.subr.bf16.mxu0 %v1008
    %1717 = vmatpush1.bf16.msra.mxu0 %v1007
    %1718 = vmatprep.subr.bf16.mxu0 %v1012
    %1719 = vmatpush1.bf16.msra.mxu0 %v1011
    %1720 = vmatprep.subr.bf16.mxu0 %v1016
    %1721 = vmatpush1.bf16.msra.mxu0 %v1015
    %1722 = vmatprep.subr.bf16.mxu0 %v1020
    %1723 = vmatpush1.bf16.msra.mxu0 %v1019
    %1724 = vmatprep.subr.bf16.mxu0 %v1024
    %1725 = vmatpush1.bf16.msra.mxu0 %v1023
    %1726 = vmatprep.subr.bf16.mxu0 %v1028
    %1727 = vmatpush1.bf16.msra.mxu0 %v1027
    %1728 = vmatprep.subr.bf16.mxu0 0
    %1729 = vmatpush1.bf16.msra.mxu0 0
    %1730 = vmatprep.subr.bf16.mxu0 0
    %1731 = vmatpush1.bf16.msra.mxu0 0
    %1732 = vmatprep.subr.bf16.mxu0 0
    %1733 = vmatpush1.bf16.msra.mxu0 0
    %1734 = vmatprep.subr.bf16.mxu0 0
    %1735 = vmatpush1.bf16.msra.mxu0 0
    %1736 = vmatprep.subr.bf16.mxu0 0
    %1737 = vmatpush1.bf16.msra.mxu0 0
    %1738 = vmatprep.subr.bf16.mxu0 0
    %1739 = vmatpush1.bf16.msra.mxu0 0
    %1740 = vmatprep.subr.bf16.mxu0 0
    %1741 = vmatpush1.bf16.msra.mxu0 0
    %1742 = vmatprep.subr.bf16.mxu0 0
    %1743 = vmatpush1.bf16.msra.mxu0 0
    %1744 = vmatprep.mubr.bf16.mxu0 0
    %1745 = vmatmul.mubr.bf16.gmra.mrb[0].mxu0 %v1670
    %v1746 = vpop.f32.mrb[0].mxu0
    %v1747 = vadd.f32 0.0, %v1746
    %v1748 = vpop.f32.mrb[0].mxu0
    %v1749 = vadd.f32 0.0, %v1748
    %v1750 = vpop.f32.mrb[0].mxu0
    %v1751 = vpop.f32.mrb[0].mxu0
    %1752 = vdwg.mxu0
    %v1753 = vadd.f32 %v1666, %v1706
    %v1754 = vadd.f32 %v1667, %v1708
    %v1755 = vadd.f32 %v1668, %v1747
    %v1756 = vadd.f32 %v1669, %v1749
    %v1757 = vxor.u32 %v1753, 2147483648
    %v1758 = vxor.u32 %v1754, 2147483648
    %v1759 = vxor.u32 %v1755, 2147483648
    %v1760 = vmul.f32 %v1757, 1.442695
    %v1761 = vpow.pop %v1760
    %v1762 = vmul.f32 %v1758, 1.442695
    %v1763 = vpow.pop %v1762
    %v1764 = vmul.f32 %v1759, 1.442695
    %v1765 = vpow.pop %v1764
    %v1766 = vadd.f32 %v1761, 1.0
    %v1767 = vadd.f32 %v1763, 1.0
    %v1768 = vadd.f32 %v1765, 1.0
    %v1769 = vrcp.pop %v1766
    %v1770 = vmul.f32 1.0, %v1769
    %v1771 = vrcp.pop %v1767
    %v1772 = vmul.f32 1.0, %v1771
    %v1773 = vrcp.pop %v1768
    %v1774 = vmul.f32 1.0, %v1773
    %v1775 = vtanh.pop %v1756
    %v1776 = vmul.f32 %v1772, %v1656
    %v1777 = vmul.f32 %v1770, %v1775
    %v1778 = vadd.f32 %v1776, %v1777
    %v1779 = vtanh.pop %v1778
    %v1780 = vmul.f32 %v1774, %v1779
    %vm1781 = vcmp.eq.s32.totalorder %v120, 5
    %v1782 = vsel %vm1781, 1, 0
    %1783 = vset.pattern.permute.xlu0 0
    %1784 = vperm.xlu0 %1783, %v1782
    %v1785 = vpop.permute.xlu0 %1784
    %vm1786 = vcmp.eq.s32.totalorder %v1785, 1
    %v1787 = vsel %vm1786, %v1780, %v1665
    %v1788 = vld [vmem:[%s800] sm:$0xff]
    %v1789 = vld [vmem:[%s800 + $0x8] sm:$0xff]
    %v1790 = vld [vmem:[%s800 + $0x10] sm:$0xff]
    %v1791 = vld [vmem:[%s800 + $0x18] sm:$0xff]
    %v1792 = vpack.c.bf16 %v1780, %v1780
    %1793 = vmatprep.subr.bf16.mxu0 %v998
    %1794 = vmatpush1.bf16.msra.mxu0 %v997
    %1795 = vmatprep.subr.bf16.mxu0 %v1002
    %1796 = vmatpush1.bf16.msra.mxu0 %v1001
    %1797 = vmatprep.subr.bf16.mxu0 %v1006
    %1798 = vmatpush1.bf16.msra.mxu0 %v1005
    %1799 = vmatprep.subr.bf16.mxu0 %v1010
    %1800 = vmatpush1.bf16.msra.mxu0 %v1009
    %1801 = vmatprep.subr.bf16.mxu0 %v1014
    %1802 = vmatpush1.bf16.msra.mxu0 %v1013
    %1803 = vmatprep.subr.bf16.mxu0 %v1018
    %1804 = vmatpush1.bf16.msra.mxu0 %v1017
    %1805 = vmatprep.subr.bf16.mxu0 %v1022
    %1806 = vmatpush1.bf16.msra.mxu0 %v1021
    %1807 = vmatprep.subr.bf16.mxu0 %v1026
    %1808 = vmatpush1.bf16.msra.mxu0 %v1025
    %1809 = vmatprep.subr.bf16.mxu0 0
    %1810 = vmatpush1.bf16.msra.mxu0 0
    %1811 = vmatprep.subr.bf16.mxu0 0
    %1812 = vmatpush1.bf16.msra.mxu0 0
    %1813 = vmatprep.subr.bf16.mxu0 0
    %1814 = vmatpush1.bf16.msra.mxu0 0
    %1815 = vmatprep.subr.bf16.mxu0 0
    %1816 = vmatpush1.bf16.msra.mxu0 0
    %1817 = vmatprep.subr.bf16.mxu0 0
    %1818 = vmatpush1.bf16.msra.mxu0 0
    %1819 = vmatprep.subr.bf16.mxu0 0
    %1820 = vmatpush1.bf16.msra.mxu0 0
    %1821 = vmatprep.subr.bf16.mxu0 0
    %1822 = vmatpush1.bf16.msra.mxu0 0
    %1823 = vmatprep.subr.bf16.mxu0 0
    %1824 = vmatpush1.bf16.msra.mxu0 0
    %1825 = vmatprep.mubr.bf16.mxu0 0
    %1826 = vmatmul.mubr.bf16.gmra.mrb[0].mxu0 %v1792
    %v1827 = vpop.f32.mrb[0].mxu0
    %v1828 = vadd.f32 0.0, %v1827
    %v1829 = vpop.f32.mrb[0].mxu0
    %v1830 = vadd.f32 0.0, %v1829
    %v1831 = vpop.f32.mrb[0].mxu0
    %v1832 = vpop.f32.mrb[0].mxu0
    %1833 = vdwg.mxu0
    %1834 = vmatprep.subr.bf16.mxu0 %v1000
    %1835 = vmatpush1.bf16.msra.mxu0 %v999
    %1836 = vmatprep.subr.bf16.mxu0 %v1004
    %1837 = vmatpush1.bf16.msra.mxu0 %v1003
    %1838 = vmatprep.subr.bf16.mxu0 %v1008
    %1839 = vmatpush1.bf16.msra.mxu0 %v1007
    %1840 = vmatprep.subr.bf16.mxu0 %v1012
    %1841 = vmatpush1.bf16.msra.mxu0 %v1011
    %1842 = vmatprep.subr.bf16.mxu0 %v1016
    %1843 = vmatpush1.bf16.msra.mxu0 %v1015
    %1844 = vmatprep.subr.bf16.mxu0 %v1020
    %1845 = vmatpush1.bf16.msra.mxu0 %v1019
    %1846 = vmatprep.subr.bf16.mxu0 %v1024
    %1847 = vmatpush1.bf16.msra.mxu0 %v1023
    %1848 = vmatprep.subr.bf16.mxu0 %v1028
    %1849 = vmatpush1.bf16.msra.mxu0 %v1027
    %1850 = vmatprep.subr.bf16.mxu0 0
    %1851 = vmatpush1.bf16.msra.mxu0 0
    %1852 = vmatprep.subr.bf16.mxu0 0
    %1853 = vmatpush1.bf16.msra.mxu0 0
    %1854 = vmatprep.subr.bf16.mxu0 0
    %1855 = vmatpush1.bf16.msra.mxu0 0
    %1856 = vmatprep.subr.bf16.mxu0 0
    %1857 = vmatpush1.bf16.msra.mxu0 0
    %1858 = vmatprep.subr.bf16.mxu0 0
    %1859 = vmatpush1.bf16.msra.mxu0 0
    %1860 = vmatprep.subr.bf16.mxu0 0
    %1861 = vmatpush1.bf16.msra.mxu0 0
    %1862 = vmatprep.subr.bf16.mxu0 0
    %1863 = vmatpush1.bf16.msra.mxu0 0
    %1864 = vmatprep.subr.bf16.mxu0 0
    %1865 = vmatpush1.bf16.msra.mxu0 0
    %1866 = vmatprep.mubr.bf16.mxu0 0
    %1867 = vmatmul.mubr.bf16.gmra.mrb[0].mxu0 %v1792
    %v1868 = vpop.f32.mrb[0].mxu0
    %v1869 = vadd.f32 0.0, %v1868
    %v1870 = vpop.f32.mrb[0].mxu0
    %v1871 = vadd.f32 0.0, %v1870
    %v1872 = vpop.f32.mrb[0].mxu0
    %v1873 = vpop.f32.mrb[0].mxu0
    %1874 = vdwg.mxu0
    %v1875 = vadd.f32 %v1788, %v1828
    %v1876 = vadd.f32 %v1789, %v1830
    %v1877 = vadd.f32 %v1790, %v1869
    %v1878 = vadd.f32 %v1791, %v1871
    %v1879 = vxor.u32 %v1875, 2147483648
    %v1880 = vxor.u32 %v1876, 2147483648
    %v1881 = vxor.u32 %v1877, 2147483648
    %v1882 = vmul.f32 %v1879, 1.442695
    %v1883 = vpow.pop %v1882
    %v1884 = vmul.f32 %v1880, 1.442695
    %v1885 = vpow.pop %v1884
    %v1886 = vmul.f32 %v1881, 1.442695
    %v1887 = vpow.pop %v1886
    %v1888 = vadd.f32 %v1883, 1.0
    %v1889 = vadd.f32 %v1885, 1.0
    %v1890 = vadd.f32 %v1887, 1.0
    %v1891 = vrcp.pop %v1888
    %v1892 = vmul.f32 1.0, %v1891
    %v1893 = vrcp.pop %v1889
    %v1894 = vmul.f32 1.0, %v1893
    %v1895 = vrcp.pop %v1890
    %v1896 = vmul.f32 1.0, %v1895
    %v1897 = vtanh.pop %v1878
    %v1898 = vmul.f32 %v1894, %v1778
    %v1899 = vmul.f32 %v1892, %v1897
    %v1900 = vadd.f32 %v1898, %v1899
    %v1901 = vtanh.pop %v1900
    %v1902 = vmul.f32 %v1896, %v1901
    %vm1903 = vcmp.eq.s32.totalorder %v120, 6
    %v1904 = vsel %vm1903, 1, 0
    %1905 = vset.pattern.permute.xlu0 0
    %1906 = vperm.xlu0 %1905, %v1904
    %v1907 = vpop.permute.xlu0 %1906
    %vm1908 = vcmp.eq.s32.totalorder %v1907, 1
    %v1909 = vsel %vm1908, %v1902, %v1787
    %v1910 = vld [vmem:[%s892] sm:$0xff]
    %v1911 = vld [vmem:[%s892 + $0x8] sm:$0xff]
    %v1912 = vld [vmem:[%s892 + $0x10] sm:$0xff]
    %v1913 = vld [vmem:[%s892 + $0x18] sm:$0xff]
    %v1914 = vpack.c.bf16 %v1902, %v1902
    %1915 = vmatprep.subr.bf16.mxu0 %v998
    %1916 = vmatpush1.bf16.msra.mxu0 %v997
    %1917 = vmatprep.subr.bf16.mxu0 %v1002
    %1918 = vmatpush1.bf16.msra.mxu0 %v1001
    %1919 = vmatprep.subr.bf16.mxu0 %v1006
    %1920 = vmatpush1.bf16.msra.mxu0 %v1005
    %1921 = vmatprep.subr.bf16.mxu0 %v1010
    %1922 = vmatpush1.bf16.msra.mxu0 %v1009
    %1923 = vmatprep.subr.bf16.mxu0 %v1014
    %1924 = vmatpush1.bf16.msra.mxu0 %v1013
    %1925 = vmatprep.subr.bf16.mxu0 %v1018
    %1926 = vmatpush1.bf16.msra.mxu0 %v1017
    %1927 = vmatprep.subr.bf16.mxu0 %v1022
    %1928 = vmatpush1.bf16.msra.mxu0 %v1021
    %1929 = vmatprep.subr.bf16.mxu0 %v1026
    %1930 = vmatpush1.bf16.msra.mxu0 %v1025
    %1931 = vmatprep.subr.bf16.mxu0 0
    %1932 = vmatpush1.bf16.msra.mxu0 0
    %1933 = vmatprep.subr.bf16.mxu0 0
    %1934 = vmatpush1.bf16.msra.mxu0 0
    %1935 = vmatprep.subr.bf16.mxu0 0
    %1936 = vmatpush1.bf16.msra.mxu0 0
    %1937 = vmatprep.subr.bf16.mxu0 0
    %1938 = vmatpush1.bf16.msra.mxu0 0
    %1939 = vmatprep.subr.bf16.mxu0 0
    %1940 = vmatpush1.bf16.msra.mxu0 0
    %1941 = vmatprep.subr.bf16.mxu0 0
    %1942 = vmatpush1.bf16.msra.mxu0 0
    %1943 = vmatprep.subr.bf16.mxu0 0
    %1944 = vmatpush1.bf16.msra.mxu0 0
    %1945 = vmatprep.subr.bf16.mxu0 0
    %1946 = vmatpush1.bf16.msra.mxu0 0
    %1947 = vmatprep.mubr.bf16.mxu0 0
    %1948 = vmatmul.mubr.bf16.gmra.mrb[0].mxu0 %v1914
    %v1949 = vpop.f32.mrb[0].mxu0
    %v1950 = vadd.f32 0.0, %v1949
    %v1951 = vpop.f32.mrb[0].mxu0
    %v1952 = vadd.f32 0.0, %v1951
    %v1953 = vpop.f32.mrb[0].mxu0
    %v1954 = vpop.f32.mrb[0].mxu0
    %1955 = vdwg.mxu0
    %1956 = vmatprep.subr.bf16.mxu0 %v1000
    %1957 = vmatpush1.bf16.msra.mxu0 %v999
    %1958 = vmatprep.subr.bf16.mxu0 %v1004
    %1959 = vmatpush1.bf16.msra.mxu0 %v1003
    %1960 = vmatprep.subr.bf16.mxu0 %v1008
    %1961 = vmatpush1.bf16.msra.mxu0 %v1007
    %1962 = vmatprep.subr.bf16.mxu0 %v1012
    %1963 = vmatpush1.bf16.msra.mxu0 %v1011
    %1964 = vmatprep.subr.bf16.mxu0 %v1016
    %1965 = vmatpush1.bf16.msra.mxu0 %v1015
    %1966 = vmatprep.subr.bf16.mxu0 %v1020
    %1967 = vmatpush1.bf16.msra.mxu0 %v1019
    %1968 = vmatprep.subr.bf16.mxu0 %v1024
    %1969 = vmatpush1.bf16.msra.mxu0 %v1023
    %1970 = vmatprep.subr.bf16.mxu0 %v1028
    %1971 = vmatpush1.bf16.msra.mxu0 %v1027
    %1972 = vmatprep.subr.bf16.mxu0 0
    %1973 = vmatpush1.bf16.msra.mxu0 0
    %1974 = vmatprep.subr.bf16.mxu0 0
    %1975 = vmatpush1.bf16.msra.mxu0 0
    %1976 = vmatprep.subr.bf16.mxu0 0
    %1977 = vmatpush1.bf16.msra.mxu0 0
    %1978 = vmatprep.subr.bf16.mxu0 0
    %1979 = vmatpush1.bf16.msra.mxu0 0
    %1980 = vmatprep.subr.bf16.mxu0 0
    %1981 = vmatpush1.bf16.msra.mxu0 0
    %1982 = vmatprep.subr.bf16.mxu0 0
    %1983 = vmatpush1.bf16.msra.mxu0 0
    %1984 = vmatprep.subr.bf16.mxu0 0
    %1985 = vmatpush1.bf16.msra.mxu0 0
    %1986 = vmatprep.subr.bf16.mxu0 0
    %1987 = vmatpush1.bf16.msra.mxu0 0
    %1988 = vmatprep.mubr.bf16.mxu0 0
    %1989 = vmatmul.mubr.bf16.gmra.mrb[0].mxu0 %v1914
    %v1990 = vpop.f32.mrb[0].mxu0
    %v1991 = vadd.f32 0.0, %v1990
    %v1992 = vpop.f32.mrb[0].mxu0
    %v1993 = vadd.f32 0.0, %v1992
    %v1994 = vpop.f32.mrb[0].mxu0
    %v1995 = vpop.f32.mrb[0].mxu0
    %1996 = vdwg.mxu0
    %v1997 = vadd.f32 %v1910, %v1950
    %v1998 = vadd.f32 %v1911, %v1952
    %v1999 = vadd.f32 %v1912, %v1991
    %v2000 = vadd.f32 %v1913, %v1993
    %v2001 = vxor.u32 %v1997, 2147483648
    %v2002 = vxor.u32 %v1998, 2147483648
    %v2003 = vxor.u32 %v1999, 2147483648
    %v2004 = vmul.f32 %v2001, 1.442695
    %v2005 = vpow.pop %v2004
    %v2006 = vmul.f32 %v2002, 1.442695
    %v2007 = vpow.pop %v2006
    %v2008 = vmul.f32 %v2003, 1.442695
    %v2009 = vpow.pop %v2008
    %v2010 = vadd.f32 %v2005, 1.0
    %v2011 = vadd.f32 %v2007, 1.0
    %v2012 = vadd.f32 %v2009, 1.0
    %v2013 = vrcp.pop %v2010
    %v2014 = vmul.f32 1.0, %v2013
    %v2015 = vrcp.pop %v2011
    %v2016 = vmul.f32 1.0, %v2015
    %v2017 = vrcp.pop %v2012
    %v2018 = vmul.f32 1.0, %v2017
    %v2019 = vtanh.pop %v2000
    %v2020 = vmul.f32 %v2016, %v1900
    %v2021 = vmul.f32 %v2014, %v2019
    %v2022 = vadd.f32 %v2020, %v2021
    %v2023 = vtanh.pop %v2022
    %v2024 = vmul.f32 %v2018, %v2023
    %vm2025 = vcmp.eq.s32.totalorder %v120, 7
    %v2026 = vsel %vm2025, 1, 0
    %2027 = vset.pattern.permute.xlu0 0
    %2028 = vperm.xlu0 %2027, %v2026
    %v2029 = vpop.permute.xlu0 %2028
    %vm2030 = vcmp.eq.s32.totalorder %v2029, 1
    %v2031 = vsel %vm2030, %v2024, %v1909
    %v2032 = vld [vmem:[#allocation9] sm:$0xff]
    %v2033 = vld [vmem:[#allocation9 + $0x8] sm:$0xff]
    %v2034 = vld [vmem:[#allocation9 + $0x10] sm:$0xff]
    %v2035 = vld [vmem:[#allocation9 + $0x18] sm:$0xff]
    %v2036 = vld [vmem:[#allocation9 + $0x20] sm:$0xff]
    %v2037 = vld [vmem:[#allocation9 + $0x28] sm:$0xff]
    %v2038 = vld [vmem:[#allocation9 + $0x30] sm:$0xff]
    %v2039 = vld [vmem:[#allocation9 + $0x38] sm:$0xff]
    %v2040 = vld [vmem:[#allocation9 + $0x40] sm:$0xff]
    %v2041 = vld [vmem:[#allocation9 + $0x48] sm:$0xff]
    %v2042 = vld [vmem:[#allocation9 + $0x50] sm:$0xff]
    %v2043 = vld [vmem:[#allocation9 + $0x58] sm:$0xff]
    %v2044 = vld [vmem:[#allocation9 + $0x60] sm:$0xff]
    %v2045 = vld [vmem:[#allocation9 + $0x68] sm:$0xff]
    %v2046 = vld [vmem:[#allocation9 + $0x70] sm:$0xff]
    %v2047 = vld [vmem:[#allocation9 + $0x78] sm:$0xff]
    %v2048 = vld [vmem:[%s6] sm:$0x1]
    %v2050 = vlaneseq
    %v2051 = vshrl.u32 %v2050, 7
    %v2052 = vsub.s32 0, %v2051
    %v2053 = vrot.slane %v2048, %v2052
    %2055 = vmatprep.subr.mxu0 0.0
    %2056 = vmatpush1.msra.mxu0 %v2032
    %2057 = vmatprep.subr.mxu0 0.0
    %2058 = vmatpush1.msra.mxu0 %v2033
    %2059 = vmatprep.subr.mxu0 0.0
    %2060 = vmatpush1.msra.mxu0 %v2034
    %2061 = vmatprep.subr.mxu0 0.0
    %2062 = vmatpush1.msra.mxu0 %v2035
    %2063 = vmatprep.subr.mxu0 0.0
    %2064 = vmatpush1.msra.mxu0 %v2036
    %2065 = vmatprep.subr.mxu0 0.0
    %2066 = vmatpush1.msra.mxu0 %v2037
    %2067 = vmatprep.subr.mxu0 0.0
    %2068 = vmatpush1.msra.mxu0 %v2038
    %2069 = vmatprep.subr.mxu0 0.0
    %2070 = vmatpush1.msra.mxu0 %v2039
    %2071 = vmatprep.subr.mxu0 0.0
    %2072 = vmatpush1.msra.mxu0 %v2040
    %2073 = vmatprep.subr.mxu0 0.0
    %2074 = vmatpush1.msra.mxu0 %v2041
    %2075 = vmatprep.subr.mxu0 0.0
    %2076 = vmatpush1.msra.mxu0 %v2042
    %2077 = vmatprep.subr.mxu0 0.0
    %2078 = vmatpush1.msra.mxu0 %v2043
    %2079 = vmatprep.subr.mxu0 0.0
    %2080 = vmatpush1.msra.mxu0 %v2044
    %2081 = vmatprep.subr.mxu0 0.0
    %2082 = vmatpush1.msra.mxu0 %v2045
    %2083 = vmatprep.subr.mxu0 0.0
    %2084 = vmatpush1.msra.mxu0 %v2046
    %2085 = vmatprep.subr.mxu0 0.0
    %2086 = vmatpush1.msra.mxu0 %v2047
    %2087 = vmatprep.subr.mxu0 0.0
    %2088 = vmatpush1.msra.mxu0 0.0
    %2089 = vmatprep.subr.mxu0 0.0
    %2090 = vmatpush1.msra.mxu0 0.0
    %2091 = vmatprep.subr.mxu0 0.0
    %2092 = vmatpush1.msra.mxu0 0.0
    %2093 = vmatprep.subr.mxu0 0.0
    %2094 = vmatpush1.msra.mxu0 0.0
    %2095 = vmatprep.subr.mxu0 0.0
    %2096 = vmatpush1.msra.mxu0 0.0
    %2097 = vmatprep.subr.mxu0 0.0
    %2098 = vmatpush1.msra.mxu0 0.0
    %2099 = vmatprep.subr.mxu0 0.0
    %2100 = vmatpush1.msra.mxu0 0.0
    %2101 = vmatprep.subr.mxu0 0.0
    %2102 = vmatpush1.msra.mxu0 0.0
    %2103 = vmatprep.subr.mxu0 0.0
    %2104 = vmatpush1.msra.mxu0 0.0
    %2105 = vmatprep.subr.mxu0 0.0
    %2106 = vmatpush1.msra.mxu0 0.0
    %2107 = vmatprep.subr.mxu0 0.0
    %2108 = vmatpush1.msra.mxu0 0.0
    %2109 = vmatprep.subr.mxu0 0.0
    %2110 = vmatpush1.msra.mxu0 0.0
    %2111 = vmatprep.subr.mxu0 0.0
    %2112 = vmatpush1.msra.mxu0 0.0
    %2113 = vmatprep.subr.mxu0 0.0
    %2114 = vmatpush1.msra.mxu0 0.0
    %2115 = vmatprep.subr.mxu0 0.0
    %2116 = vmatpush1.msra.mxu0 0.0
    %2117 = vmatprep.subr.mxu0 0.0
    %2118 = vmatpush1.msra.mxu0 0.0
    %2119 = vmatprep.mubr.f32.mxu0 0.0
    %2120 = vmatmul.mubr.f32.gmra.mrb[0].mxu0 %v2031
    %v2121 = vpop.f32.mrb[0].mxu0
    %v2122 = vadd.f32 %v2053, %v2121
    %v2123 = vpop.f32.mrb[0].mxu0
    %2124 = vdwg.mxu0
    %2125 = vst [vmem:[#allocation11] sm:$0xff] %v2122
    // Predicated region
    $region46: #{tpu_custom_call.1} parent=1 // pred_check
      _
    $region47: #{tpu_custom_call.1} parent=1 // pred_check_branch
      %2127 = sbr.rel (0) target = $region49
    $region48: #{tpu_custom_call.1} parent=1 // pred_region
      %s2129 = ssub.s32 128, 128
      %2130 = vsyncadd [#allocation5], %s2129
      %s2132 = sshll.u32 [#allocation11], 4
      %s2133 = int_to_ptr.vmem [resolvable:$true] %s2132
      %2135 = dma.vmem_to_hbm [thread:$0]  %s2133, 128, %s7, [#allocation5]
    $region49: #{tpu_custom_call.1} parent=1 // pred_fallthru
      _
    // Predicated region
    $region50: #{tpu_custom_call.1} parent=1 // pred_check
      _
    $region51: #{tpu_custom_call.1} parent=1 // pred_check_branch
      %2137 = sbr.rel (0) target = $region53
    $region52: #{tpu_custom_call.1} parent=1 // pred_region
      %2138 = dma.done [#allocation5], 128
    $region53: #{tpu_custom_call.1} parent=1 // pred_fallthru
      _
    %2139 = vsyncpa [#allocation4], 1
    %2140 = vsyncpa [#allocation7], 1
    %2141 = vsyncpa [#allocation10], 1
    %2142 = vsyncpa [#allocation5], 1

</llo_original>
